<compile_context>
chip_gen: v7x
topology: tpu7x:2x2x1
jax: 0.10.0
libtpu: 0.0.40
codegen_flags: <defaults>
</compile_context>

<pallas_src>
import functools

import jax
import jax.numpy as jnp
from jax.experimental import pallas as pl
from jax.experimental.pallas import tpu as pltpu

LN_EPS_BERT = 1e-12   # DistilBERT internal LayerNorms
LN_EPS_HEAD = 1e-5    # nn.LayerNorm default (pre_layernorm / layernorm in head)

NUM_ASPECT_HEADS = 5
HEAD_PAD = 8          # pad the 5 aspect heads to 8 lanes for a clean layout
FFN_CHUNK = 512       # lane-aligned F tile for the chunked FFN contraction

# per-layer vector slab `lvec` [9, H] rows: bq, bk, bv, bo, ln1_g, ln1_b, b2, ln2_g, ln2_b
# global  vector slab `gvec` [7, H] rows: emb_ln_g, emb_ln_b, pre_ln_g, pre_ln_b, bc, ln_g, ln_b


# ----------------------------------------------------------------------------
# shared math (used both inside the Pallas kernel and by the pure-JAX ref)
# ----------------------------------------------------------------------------
def _row(m, i):
    return m[i:i + 1]                      # [1, width] — keep rank 2 (Mosaic-friendly)


def _layernorm(x, g, b, eps):
    mu = jnp.mean(x, axis=-1, keepdims=True)
    var = jnp.mean((x - mu) ** 2, axis=-1, keepdims=True)
    return (x - mu) * jax.lax.rsqrt(var + eps) * g + b


def _encoder_layer_math(x, mask_bias, wqkv, wo, w1, w2, lvec, b1, *,
                        n_heads, approx_recip, f_chunk, ctx_ref=None):
    """One DistilBERT transformer layer. bf16 MXU operands, f32 accumulation;
    layernorm / softmax stay in f32.  If `ctx_ref` (a VMEM scratch) is given,
    each head's context is stored into it (kernel path); otherwise heads are
    concatenated (pure-JAX reference path)."""
    B, S, H = x.shape
    dh = H // n_heads
    scale = jnp.float32(1.0 / (dh ** 0.5))

    # fused Q/K/V projection: one full-K matmul instead of 3
    x_bf = x.astype(jnp.bfloat16)
    qkv = jnp.einsum('bsh,hd->bsd', x_bf, wqkv, preferred_element_type=jnp.float32)
    # cast to bf16 immediately after the bias add: the f32 [B,S,3H] dies here
    q = (qkv[..., 0 * H:1 * H] + _row(lvec, 0)).astype(jnp.bfloat16)
    k = (qkv[..., 1 * H:2 * H] + _row(lvec, 1)).astype(jnp.bfloat16)
    v = (qkv[..., 2 * H:3 * H] + _row(lvec, 2)).astype(jnp.bfloat16)

    # TODO(synk): verify via pl.lower_as_mlir whether the 'bqd,bkd->bqk' einsum
    # inserts a per-head XLU transpose of k; if so pre-transpose K once/layer.
    ctx_parts = []
    for h in range(n_heads):                       # static loop over heads
        sl = slice(h * dh, (h + 1) * dh)           # static lane slice
        s = jnp.einsum('bqd,bkd->bqk', q[..., sl], k[..., sl],
                       preferred_element_type=jnp.float32) * scale
        s = s + mask_bias                          # mask bias precomputed once
        s = s - jnp.max(s, axis=-1, keepdims=True)
        p = jnp.exp(s)
        denom = jnp.sum(p, axis=-1, keepdims=True)
        if approx_recip:
            p = p * pl.reciprocal(denom, approx=True)   # EUP slot, nearly free
        else:
            p = p / denom
        ctx_h = jnp.einsum('bqk,bkd->bqd', p.astype(jnp.bfloat16), v[..., sl],
                           preferred_element_type=jnp.float32)
        if ctx_ref is not None:
            # store the head's context straight into VMEM scratch: ends this
            # head's live range (no n_heads concurrent [S,S] tensors) and
            # avoids the lane concat relayout.
            ctx_ref[:, :, sl] = ctx_h
        else:
            ctx_parts.append(ctx_h)
    if ctx_ref is not None:
        ctx = ctx_ref[...]
    else:
        ctx = jnp.concatenate(ctx_parts, axis=-1)  # reference path only

    # single full-K output projection on the concatenated context
    attn = jnp.einsum('bsh,hd->bsd', ctx.astype(jnp.bfloat16), wo,
                      preferred_element_type=jnp.float32) + _row(lvec, 3)
    x1 = _layernorm(attn + x, _row(lvec, 4), _row(lvec, 5), LN_EPS_BERT)

    # FFN chunked over F so the f32 hidden never exceeds [B, S, f_chunk]
    x1_bf = x1.astype(jnp.bfloat16)
    F = w1.shape[-1]
    fc = min(f_chunk, F)
    n_chunks = (F + fc - 1) // fc
    ffn = None
    for c in range(n_chunks):                      # static chunk loop
        f0 = c * fc
        f1 = min(F, f0 + fc)
        hdn = jnp.einsum('bsh,hf->bsf', x1_bf, w1[:, f0:f1],
                         preferred_element_type=jnp.float32) + b1[:, f0:f1]
        # TODO(synk): HuggingFace DistilBERT uses exact erf GELU; tanh approximation here.
        hdn = jax.nn.gelu(hdn, approximate=True)
        part = jnp.einsum('bsf,fh->bsh', hdn.astype(jnp.bfloat16), w2[f0:f1, :],
                          preferred_element_type=jnp.float32)
        ffn = part if ffn is None else ffn + part
    ffn = ffn + _row(lvec, 6)
    return _layernorm(ffn + x1, _row(lvec, 7), _row(lvec, 8), LN_EPS_BERT)


def _head_math(cls, pln_g, pln_b, wc, bc, ln_g, ln_b, wh, bh):
    y = _layernorm(cls, pln_g, pln_b, LN_EPS_HEAD)
    # dropout: eval-mode identity
    y = jnp.dot(y.astype(jnp.bfloat16), wc, preferred_element_type=jnp.float32) + bc
    y = jnp.maximum(y, 0.0)                 # ReLU
    y = _layernorm(y, ln_g, ln_b, LN_EPS_HEAD)
    # dropout: eval-mode identity
    logits = jnp.dot(y, wh, preferred_element_type=jnp.float32) + bh
    return jax.nn.sigmoid(logits)


def _mask_bias(attention_mask):
    # [B, 1, S] additive attention bias, computed once per forward
    return jnp.where(attention_mask[:, None, :] > 0,
                     jnp.float32(0.0), jnp.float32(-1e9))


# ----------------------------------------------------------------------------
# fused encoder + head Pallas kernel
# ----------------------------------------------------------------------------
def encoder_head_kernel(n_heads, n_layers, f_chunk,
                        emb_ref, mbias_ref, wqkv_ref, wo_ref, w1_ref, w2_ref,
                        lvec_ref, b1_ref, gvec_ref, wc_ref, wh_ref, bh_ref,
                        probs_ref, x_ref, ctx_ref):
    l = pl.program_id(1)                    # layer axis ("arbitrary", carries x_ref)
    gv = gvec_ref[...]                      # [7, H]

    @pl.when(l == 0)
    def _():                                # fused embedding LayerNorm
        x_ref[...] = _layernorm(emb_ref[...], _row(gv, 0), _row(gv, 1), LN_EPS_BERT)

    x_new = _encoder_layer_math(
        x_ref[...], mbias_ref[...],
        wqkv_ref[0], wo_ref[0], w1_ref[0], w2_ref[0],
        lvec_ref[0], b1_ref[0],
        n_heads=n_heads, approx_recip=True, f_chunk=f_chunk, ctx_ref=ctx_ref)
    x_ref[...] = x_new                      # activation stays resident in VMEM

    @pl.when(l == n_layers - 1)
    def _():                                # fused classifier head on the CLS row
        cls = x_new[:, 0, :]                # last_hidden_state[:, 0, :]
        probs = _head_math(
            cls, _row(gv, 2), _row(gv, 3), wc_ref[...], _row(gv, 4),
            _row(gv, 5), _row(gv, 6), wh_ref[...], bh_ref[...])
        probs_ref[...] = probs[:, None, :]  # [bt, 1, HEAD_PAD]


# ----------------------------------------------------------------------------
# generation-aware VMEM budget / batch-tile selection
# ----------------------------------------------------------------------------
def _vmem_budget_bytes():
    cap = None
    try:
        info = pltpu.get_tpu_info()
        cap = getattr(info, 'vmem_capacity_bytes', None)
    except Exception:
        cap = None
    if not cap:
        cap = 64 << 20            # conservative fallback: v7x-class 64 MiB VMEM
    # ~82% of physical leaves headroom for Mosaic internal scratch / pipeline
    # buffers: ~105 MiB on 128 MiB chips (v5e/v6e), ~52 MiB on 64 MiB (v7x).
    return int(cap * 0.82)


def _vmem_estimate_bytes(bt, S, H, F, f_chunk):
    bf16, f32 = 2, 4
    fc = min(f_chunk, F)
    per_layer_w = bf16 * (H * 3 * H + H * H + H * F + F * H) + f32 * (9 * H + F)
    weights = 2 * per_layer_w                                    # double-buffered
    globals_ = f32 * (7 * H + H * HEAD_PAD + HEAD_PAD) + bf16 * H * H
    io_blocks = 2 * f32 * (bt * S * H + bt * S)                  # emb + mask, dbuf
    scratch = 2 * f32 * bt * S * H                               # x resident + ctx
    live = (bf16 * 3 * bt * S * H            # q/k/v (bf16)
            + 2 * f32 * bt * S * S           # a couple of [S,S] score tiles in flight
            + f32 * bt * S * fc              # FFN hidden chunk
            + 3 * f32 * bt * S * H)          # x1 / ffn accumulator / headroom
    return weights + globals_ + io_blocks + scratch + live + (4 << 20)


def _choose_batch_tile(B, S, H, F, f_chunk, budget, prefer_two_tiles):
    divisors = [d for d in range(1, B + 1) if B % d == 0]
    # On v7x-class chips prefer nb == 2 so both TensorCores are fed; otherwise
    # prefer nb == 1 so per-layer weights are streamed from HBM only once.
    start = B // 2 if (prefer_two_tiles and B % 2 == 0) else B
    for bt in sorted([d for d in divisors if d <= start], reverse=True):
        if _vmem_estimate_bytes(bt, S, H, F, f_chunk) <= budget:
            return bt
    return 1


def bert_cat_extr_forward(params, input_ids, attention_mask, *, batch_tile=None):
    B, S = input_ids.shape
    H = params['gvec'].shape[-1]
    F = params['w1'].shape[-1]
    L = params['n_layers']
    n_heads = params['n_heads']

    # glue: embedding gather + position add (data-dependent gather stays in JAX)
    emb = (jnp.take(params['word_emb'], input_ids, axis=0)
           + params['pos_emb'][:S][None, :, :]).astype(jnp.float32)
    mbias = _mask_bias(attention_mask)                            # [B, 1, S]

    budget = _vmem_budget_bytes()
    prefer_two = budget <= (56 << 20)        # 64 MiB-class chip => v7x, 2 TCs
    if batch_tile is None:
        bt = _choose_batch_tile(B, S, H, F, FFN_CHUNK, budget, prefer_two)
    else:
        bt = batch_tile
    assert B % bt == 0
    nb = B // bt

    bmap = lambda bi, l: (bi, 0, 0)          # per-batch-tile, constant across layers
    lmap = lambda bi, l: (l, 0, 0)           # per-layer weights
    gmap = lambda bi, l: (0, 0)              # globals

    in_specs = [
        pl.BlockSpec((bt, S, H), bmap),                  # emb
        pl.BlockSpec((bt, 1, S), bmap),                  # mask bias
        pl.BlockSpec((1, H, 3 * H), lmap),               # wqkv   (bf16)
        pl.BlockSpec((1, H, H), lmap),                   # wo     (bf16)
        pl.BlockSpec((1, H, F), lmap),                   # w1     (bf16)
        pl.BlockSpec((1, F, H), lmap),                   # w2     (bf16)
        pl.BlockSpec((1, 9, H), lmap),                   # lvec slab (f32)
        pl.BlockSpec((1, 1, F), lmap),                   # b1     (f32)
        pl.BlockSpec((7, H), gmap),                      # gvec slab (f32)
        pl.BlockSpec((H, H), gmap),                      # wc     (bf16)
        pl.BlockSpec((H, HEAD_PAD), gmap),               # wh     (f32)
        pl.BlockSpec((1, HEAD_PAD), gmap),               # bh     (f32)
    ]
    out_specs = pl.BlockSpec((bt, 1, HEAD_PAD), lambda bi, l: (bi, 0, 0))

    probs = pl.pallas_call(
        functools.partial(encoder_head_kernel, n_heads, L, FFN_CHUNK),
        out_shape=jax.ShapeDtypeStruct((B, 1, HEAD_PAD), jnp.float32),
        grid_spec=pltpu.PrefetchScalarGridSpec(
            num_scalar_prefetch=0,
            grid=(nb, L),
            in_specs=in_specs,
            out_specs=out_specs,
            scratch_shapes=[pltpu.VMEM((bt, S, H), jnp.float32),    # resident x
                            pltpu.VMEM((bt, S, H), jnp.float32)]),  # ctx heads
        compiler_params=pltpu.CompilerParams(
            dimension_semantics=("parallel", "arbitrary"),
            vmem_limit_bytes=int(budget)),
    )(emb, mbias, params['wqkv'], params['wo'], params['w1'], params['w2'],
      params['lvec'], params['b1'], params['gvec'], params['wc'],
      params['wh'], params['bh'])

    probs = probs[:, 0, :]
    return tuple(probs[:, i] for i in range(NUM_ASPECT_HEADS))


# ----------------------------------------------------------------------------
# synthetic deterministic parameters
# ----------------------------------------------------------------------------
def init_params(key, vocab, max_pos, H, F, n_layers, n_heads):
    keys = iter(jax.random.split(key, 16 + 12 * n_layers))

    def nrm(shape, scale=0.02):
        return (scale * jax.random.normal(next(keys), shape)).astype(jnp.float32)

    # TODO(synk): DistilBertModel.from_pretrained checkpoint loading has no Pallas
    # equivalent; weights are synthetic deterministic values.
    params = {'n_heads': n_heads, 'n_layers': n_layers,
              'word_emb': nrm((vocab, H)), 'pos_emb': nrm((max_pos, H))}

    wqkv, wo, w1, w2, lvec, b1 = [], [], [], [], [], []
    for _ in range(n_layers):
        wqkv.append(nrm((H, 3 * H)))
        wo.append(nrm((H, H)))
        w1.append(nrm((H, F)))
        w2.append(nrm((F, H)))
        bqkvo = nrm((4, H))                                   # bq, bk, bv, bo
        ln1_g = 1.0 + nrm((1, H), 0.1); ln1_b = nrm((1, H), 0.1)
        b2_v = nrm((1, H))
        ln2_g = 1.0 + nrm((1, H), 0.1); ln2_b = nrm((1, H), 0.1)
        lvec.append(jnp.concatenate([bqkvo, ln1_g, ln1_b, b2_v, ln2_g, ln2_b], 0))
        b1.append(nrm((1, F)))

    params['wqkv'] = jnp.stack(wqkv).astype(jnp.bfloat16)     # [L, H, 3H]
    params['wo'] = jnp.stack(wo).astype(jnp.bfloat16)         # [L, H, H]
    params['w1'] = jnp.stack(w1).astype(jnp.bfloat16)         # [L, H, F]
    params['w2'] = jnp.stack(w2).astype(jnp.bfloat16)         # [L, F, H]
    params['lvec'] = jnp.stack(lvec)                          # [L, 9, H] f32
    params['b1'] = jnp.stack(b1)                              # [L, 1, F] f32

    emb_ln_g = 1.0 + nrm((1, H), 0.1); emb_ln_b = nrm((1, H), 0.1)
    pre_ln_g = 1.0 + nrm((1, H), 0.1); pre_ln_b = nrm((1, H), 0.1)
    bc = nrm((1, H))
    ln_g = 1.0 + nrm((1, H), 0.1); ln_b = nrm((1, H), 0.1)
    params['gvec'] = jnp.concatenate(
        [emb_ln_g, emb_ln_b, pre_ln_g, pre_ln_b, bc, ln_g, ln_b], 0)   # [7, H]
    params['wc'] = nrm((H, H)).astype(jnp.bfloat16)
    wh5 = nrm((H, NUM_ASPECT_HEADS))
    params['wh'] = jnp.concatenate(
        [wh5, jnp.zeros((H, HEAD_PAD - NUM_ASPECT_HEADS), jnp.float32)], axis=1)
    params['bh'] = jnp.concatenate(
        [nrm((1, NUM_ASPECT_HEADS)),
         jnp.zeros((1, HEAD_PAD - NUM_ASPECT_HEADS), jnp.float32)], axis=1)
    return params


# ----------------------------------------------------------------------------
# pure-JAX reference (same math, exact reciprocal instead of approx)
# ----------------------------------------------------------------------------
def reference_forward(params, input_ids, attention_mask):
    B, S = input_ids.shape
    emb = (jnp.take(params['word_emb'], input_ids, axis=0)
           + params['pos_emb'][:S][None, :, :]).astype(jnp.float32)
    gv = params['gvec']
    x = _layernorm(emb, _row(gv, 0), _row(gv, 1), LN_EPS_BERT)
    mbias = _mask_bias(attention_mask)
    for l in range(params['n_layers']):
        x = _encoder_layer_math(
            x, mbias, params['wqkv'][l], params['wo'][l],
            params['w1'][l], params['w2'][l], params['lvec'][l], params['b1'][l],
            n_heads=params['n_heads'], approx_recip=False,
            f_chunk=FFN_CHUNK, ctx_ref=None)
        x = x.astype(jnp.float32)
    cls = x[:, 0, :]
    probs = _head_math(cls, _row(gv, 2), _row(gv, 3), params['wc'], _row(gv, 4),
                       _row(gv, 5), _row(gv, 6), params['wh'], params['bh'])
    return tuple(probs[:, i] for i in range(NUM_ASPECT_HEADS))


if __name__ == "__main__":
    B, S, H, F = 2, 8, 32, 128
    N_LAYERS, N_HEADS = 2, 2
    VOCAB, MAX_POS = 100, 16

    root = jax.random.PRNGKey(0)
    k_params, k_ids = jax.random.split(root)
    params = init_params(k_params, VOCAB, MAX_POS, H, F, N_LAYERS, N_HEADS)

    input_ids = jax.random.randint(k_ids, (B, S), 0, VOCAB, dtype=jnp.int32)
    attention_mask = jnp.array(
        [[1, 1, 1, 1, 1, 1, 1, 1],
         [1, 1, 1, 1, 1, 0, 0, 0]], dtype=jnp.int32)

    outs = bert_cat_extr_forward(params, input_ids, attention_mask)
    outs = jax.block_until_ready(outs)

    refs = reference_forward(params, input_ids, attention_mask)
    for o, r in zip(outs, refs):
        assert o.shape == (B,)
        # kernel uses approx reciprocal in softmax; everything else (incl. bf16
        # matmul casts, FFN chunk boundaries) matches the reference structure.
        assert jnp.allclose(o, r, atol=2e-3, rtol=2e-3), (o, r)

    print("KERNEL_OK")
</pallas_src>

<mosaic_0001>
module attributes {stable_mosaic.version = 11 : i64} {
  func.func @encoder_head_kernel(%arg0: i32, %arg1: i32, %arg2: memref<1x8x32xf32, #tpu.memory_space<vmem>>, %arg3: memref<1x1x8xf32, #tpu.memory_space<vmem>>, %arg4: memref<1x32x96xbf16, #tpu.memory_space<vmem>>, %arg5: memref<1x32x32xbf16, #tpu.memory_space<vmem>>, %arg6: memref<1x32x128xbf16, #tpu.memory_space<vmem>>, %arg7: memref<1x128x32xbf16, #tpu.memory_space<vmem>>, %arg8: memref<1x9x32xf32, #tpu.memory_space<vmem>>, %arg9: memref<1x1x128xf32, #tpu.memory_space<vmem>>, %arg10: memref<7x32xf32, #tpu.memory_space<vmem>>, %arg11: memref<32x32xbf16, #tpu.memory_space<vmem>>, %arg12: memref<32x8xf32, #tpu.memory_space<vmem>>, %arg13: memref<1x8xf32, #tpu.memory_space<vmem>>, %arg14: memref<1x1x8xf32, #tpu.memory_space<vmem>>, %arg15: memref<1x8x32xf32, #tpu.memory_space<vmem>>, %arg16: memref<1x8x32xf32, #tpu.memory_space<vmem>>) attributes {dimension_semantics = [#tpu.dimension_semantics<parallel>, #tpu.dimension_semantics<arbitrary>], iteration_bounds = array<i64: 2, 2>, scalar_prefetch = 0 : i64, scratch_operands = 2 : i64, tpu.core_type = #tpu.core_type<tc>, window_params = [{transform_indices = @transform_0, window_bounds = array<i64: 1, 8, 32>}, {transform_indices = @transform_1, window_bounds = array<i64: 1, 1, 8>}, {transform_indices = @transform_2, window_bounds = array<i64: 1, 32, 96>}, {transform_indices = @transform_3, window_bounds = array<i64: 1, 32, 32>}, {transform_indices = @transform_4, window_bounds = array<i64: 1, 32, 128>}, {transform_indices = @transform_5, window_bounds = array<i64: 1, 128, 32>}, {transform_indices = @transform_6, window_bounds = array<i64: 1, 9, 32>}, {transform_indices = @transform_7, window_bounds = array<i64: 1, 1, 128>}, {pipeline_mode = #tpu.pipeline_mode<synchronous>, transform_indices = @transform_8, window_bounds = array<i64: 7, 32>}, {pipeline_mode = #tpu.pipeline_mode<synchronous>, transform_indices = @transform_9, window_bounds = array<i64: 32, 32>}, {pipeline_mode = #tpu.pipeline_mode<synchronous>, transform_indices = @transform_10, window_bounds = array<i64: 32, 8>}, {pipeline_mode = #tpu.pipeline_mode<synchronous>, transform_indices = @transform_11, window_bounds = array<i64: 1, 8>}, {transform_indices = @transform_12, window_bounds = array<i64: 1, 1, 8>}]} {
    %c0 = arith.constant 0 : index
    %c0_0 = arith.constant 0 : index
    %0 = vector.load %arg10[%c0, %c0_0] : memref<7x32xf32, #tpu.memory_space<vmem>>, vector<7x32xf32>
    %c0_i32 = arith.constant 0 : i32
    %1 = arith.cmpi eq, %arg1, %c0_i32 : i32
    %2 = arith.extui %1 : i1 to i32
    %c0_i32_1 = arith.constant 0 : i32
    %3 = arith.cmpi ne, %2, %c0_i32_1 : i32
    scf.if %3 {
      %c0_65 = arith.constant 0 : index
      %c0_66 = arith.constant 0 : index
      %c0_67 = arith.constant 0 : index
      %169 = vector.load %arg2[%c0_65, %c0_66, %c0_67] : memref<1x8x32xf32, #tpu.memory_space<vmem>>, vector<1x8x32xf32>
      %170 = vector.extract_strided_slice %0 {offsets = [0, 0], sizes = [1, 32], strides = [1, 1]} : vector<7x32xf32> to vector<1x32xf32>
      %171 = vector.extract_strided_slice %0 {offsets = [1, 0], sizes = [1, 32], strides = [1, 1]} : vector<7x32xf32> to vector<1x32xf32>
      %cst_68 = arith.constant dense<0.000000e+00> : vector<1x8xf32>
      %172 = vector.multi_reduction <add>, %169, %cst_68 [2] : vector<1x8x32xf32> to vector<1x8xf32>
      %173 = vector.shape_cast %172 : vector<1x8xf32> to vector<1x8x1xf32>
      %cst_69 = arith.constant 3.200000e+01 : f32
      %174 = vector.broadcast %cst_69 : f32 to vector<1x8x1xf32>
      %175 = arith.divf %173, %174 : vector<1x8x1xf32>
      %176 = vector.broadcast %175 : vector<1x8x1xf32> to vector<1x8x32xf32>
      %177 = arith.subf %169, %176 : vector<1x8x32xf32>
      %178 = arith.mulf %177, %177 : vector<1x8x32xf32>
      %cst_70 = arith.constant dense<0.000000e+00> : vector<1x8xf32>
      %179 = vector.multi_reduction <add>, %178, %cst_70 [2] : vector<1x8x32xf32> to vector<1x8xf32>
      %180 = vector.shape_cast %179 : vector<1x8xf32> to vector<1x8x1xf32>
      %cst_71 = arith.constant 3.200000e+01 : f32
      %181 = vector.broadcast %cst_71 : f32 to vector<1x8x1xf32>
      %182 = arith.divf %180, %181 : vector<1x8x1xf32>
      %183 = vector.broadcast %175 : vector<1x8x1xf32> to vector<1x8x32xf32>
      %184 = arith.subf %169, %183 : vector<1x8x32xf32>
      %cst_72 = arith.constant 9.99999996E-13 : f32
      %185 = vector.broadcast %cst_72 : f32 to vector<1x8x1xf32>
      %186 = arith.addf %182, %185 : vector<1x8x1xf32>
      %187 = math.rsqrt %186 : vector<1x8x1xf32>
      %188 = vector.broadcast %187 : vector<1x8x1xf32> to vector<1x8x32xf32>
      %189 = arith.mulf %184, %188 : vector<1x8x32xf32>
      %190 = vector.shape_cast %170 : vector<1x32xf32> to vector<1x1x32xf32>
      %191 = vector.broadcast %190 : vector<1x1x32xf32> to vector<1x8x32xf32>
      %192 = arith.mulf %189, %191 : vector<1x8x32xf32>
      %193 = vector.shape_cast %171 : vector<1x32xf32> to vector<1x1x32xf32>
      %194 = vector.broadcast %193 : vector<1x1x32xf32> to vector<1x8x32xf32>
      %195 = arith.addf %192, %194 : vector<1x8x32xf32>
      %c0_73 = arith.constant 0 : index
      %c0_74 = arith.constant 0 : index
      %c0_75 = arith.constant 0 : index
      %196 = vector.load %arg15[%c0_73, %c0_74, %c0_75] : memref<1x8x32xf32, #tpu.memory_space<vmem>>, vector<1x8x32xf32>
      tpu.vector_store %arg15[%c0_73, %c0_74, %c0_75], %195 {strides = array<i32>} : memref<1x8x32xf32, #tpu.memory_space<vmem>>, vector<1x8x32xf32>,
    } else {
    }
    %c0_2 = arith.constant 0 : index
    %c0_3 = arith.constant 0 : index
    %c0_4 = arith.constant 0 : index
    %4 = vector.load %arg15[%c0_2, %c0_3, %c0_4] : memref<1x8x32xf32, #tpu.memory_space<vmem>>, vector<1x8x32xf32>
    %c0_5 = arith.constant 0 : index
    %c0_6 = arith.constant 0 : index
    %c0_7 = arith.constant 0 : index
    %5 = vector.load %arg3[%c0_5, %c0_6, %c0_7] : memref<1x1x8xf32, #tpu.memory_space<vmem>>, vector<1x1x8xf32>
    %c0_8 = arith.constant 0 : index
    %c0_9 = arith.constant 0 : index
    %c0_10 = arith.constant 0 : index
    %6 = vector.load %arg4[%c0_8, %c0_9, %c0_10] : memref<1x32x96xbf16, #tpu.memory_space<vmem>>, vector<1x32x96xbf16>
    %7 = vector.shape_cast %6 : vector<1x32x96xbf16> to vector<32x96xbf16>
    %c0_11 = arith.constant 0 : index
    %c0_12 = arith.constant 0 : index
    %c0_13 = arith.constant 0 : index
    %8 = vector.load %arg5[%c0_11, %c0_12, %c0_13] : memref<1x32x32xbf16, #tpu.memory_space<vmem>>, vector<1x32x32xbf16>
    %9 = vector.shape_cast %8 : vector<1x32x32xbf16> to vector<32x32xbf16>
    %c0_14 = arith.constant 0 : index
    %c0_15 = arith.constant 0 : index
    %c0_16 = arith.constant 0 : index
    %10 = vector.load %arg6[%c0_14, %c0_15, %c0_16] : memref<1x32x128xbf16, #tpu.memory_space<vmem>>, vector<1x32x128xbf16>
    %11 = vector.shape_cast %10 : vector<1x32x128xbf16> to vector<32x128xbf16>
    %c0_17 = arith.constant 0 : index
    %c0_18 = arith.constant 0 : index
    %c0_19 = arith.constant 0 : index
    %12 = vector.load %arg7[%c0_17, %c0_18, %c0_19] : memref<1x128x32xbf16, #tpu.memory_space<vmem>>, vector<1x128x32xbf16>
    %13 = vector.shape_cast %12 : vector<1x128x32xbf16> to vector<128x32xbf16>
    %c0_20 = arith.constant 0 : index
    %c0_21 = arith.constant 0 : index
    %c0_22 = arith.constant 0 : index
    %14 = vector.load %arg8[%c0_20, %c0_21, %c0_22] : memref<1x9x32xf32, #tpu.memory_space<vmem>>, vector<1x9x32xf32>
    %15 = vector.shape_cast %14 : vector<1x9x32xf32> to vector<9x32xf32>
    %c0_23 = arith.constant 0 : index
    %c0_24 = arith.constant 0 : index
    %c0_25 = arith.constant 0 : index
    %16 = vector.load %arg9[%c0_23, %c0_24, %c0_25] : memref<1x1x128xf32, #tpu.memory_space<vmem>>, vector<1x1x128xf32>
    %17 = vector.shape_cast %16 : vector<1x1x128xf32> to vector<1x128xf32>
    %18 = arith.truncf %4 : vector<1x8x32xf32> to vector<1x8x32xbf16>
    "tpu.trace_start"() <{level = 10 : i32, message = "bsh,hd->bsd"}> : () -> ()
    %cst = arith.constant dense<0.000000e+00> : vector<1x8x96xf32>
    %19 = tpu.matmul %18, %7, %cst {dimension_numbers = #tpu.dot_dimension_numbers<[2], [0], [0, 1], [1], [0, 0, 0, 1, 1, 1], [], []>} : vector<1x8x32xbf16>, vector<32x96xbf16>, vector<1x8x96xf32> -> vector<1x8x96xf32>
    "tpu.trace_stop"() : () -> ()
    %20 = vector.extract_strided_slice %19 {offsets = [0, 0, 0], sizes = [1, 8, 32], strides = [1, 1, 1]} : vector<1x8x96xf32> to vector<1x8x32xf32>
    %21 = vector.extract_strided_slice %15 {offsets = [0, 0], sizes = [1, 32], strides = [1, 1]} : vector<9x32xf32> to vector<1x32xf32>
    %22 = vector.shape_cast %21 : vector<1x32xf32> to vector<1x1x32xf32>
    %23 = vector.broadcast %22 : vector<1x1x32xf32> to vector<1x8x32xf32>
    %24 = arith.addf %20, %23 : vector<1x8x32xf32>
    %25 = arith.truncf %24 : vector<1x8x32xf32> to vector<1x8x32xbf16>
    %26 = vector.extract_strided_slice %19 {offsets = [0, 0, 32], sizes = [1, 8, 32], strides = [1, 1, 1]} : vector<1x8x96xf32> to vector<1x8x32xf32>
    %27 = vector.extract_strided_slice %15 {offsets = [1, 0], sizes = [1, 32], strides = [1, 1]} : vector<9x32xf32> to vector<1x32xf32>
    %28 = vector.shape_cast %27 : vector<1x32xf32> to vector<1x1x32xf32>
    %29 = vector.broadcast %28 : vector<1x1x32xf32> to vector<1x8x32xf32>
    %30 = arith.addf %26, %29 : vector<1x8x32xf32>
    %31 = arith.truncf %30 : vector<1x8x32xf32> to vector<1x8x32xbf16>
    %32 = vector.extract_strided_slice %19 {offsets = [0, 0, 64], sizes = [1, 8, 32], strides = [1, 1, 1]} : vector<1x8x96xf32> to vector<1x8x32xf32>
    %33 = vector.extract_strided_slice %15 {offsets = [2, 0], sizes = [1, 32], strides = [1, 1]} : vector<9x32xf32> to vector<1x32xf32>
    %34 = vector.shape_cast %33 : vector<1x32xf32> to vector<1x1x32xf32>
    %35 = vector.broadcast %34 : vector<1x1x32xf32> to vector<1x8x32xf32>
    %36 = arith.addf %32, %35 : vector<1x8x32xf32>
    %37 = arith.truncf %36 : vector<1x8x32xf32> to vector<1x8x32xbf16>
    %38 = vector.extract_strided_slice %25 {offsets = [0, 0, 0], sizes = [1, 8, 16], strides = [1, 1, 1]} : vector<1x8x32xbf16> to vector<1x8x16xbf16>
    %39 = vector.extract_strided_slice %31 {offsets = [0, 0, 0], sizes = [1, 8, 16], strides = [1, 1, 1]} : vector<1x8x32xbf16> to vector<1x8x16xbf16>
    "tpu.trace_start"() <{level = 10 : i32, message = "bqd,bkd->bqk"}> : () -> ()
    %cst_26 = arith.constant dense<0.000000e+00> : vector<1x8x8xf32>
    %40 = tpu.matmul %38, %39, %cst_26 {dimension_numbers = #tpu.dot_dimension_numbers<[2], [2], [1], [1], [0, 0, 0, 1, 1, 1], [0], [0]>} : vector<1x8x16xbf16>, vector<1x8x16xbf16>, vector<1x8x8xf32> -> vector<1x8x8xf32>
    "tpu.trace_stop"() : () -> ()
    %cst_27 = arith.constant 2.500000e-01 : f32
    %41 = vector.broadcast %cst_27 : f32 to vector<1x8x8xf32>
    %42 = arith.mulf %40, %41 : vector<1x8x8xf32>
    %43 = vector.broadcast %5 : vector<1x1x8xf32> to vector<1x8x8xf32>
    %44 = arith.addf %42, %43 : vector<1x8x8xf32>
    %cst_28 = arith.constant dense<0xFF800000> : vector<1x8xf32>
    %45 = vector.multi_reduction <maximumf>, %44, %cst_28 [2] : vector<1x8x8xf32> to vector<1x8xf32>
    %46 = vector.shape_cast %45 : vector<1x8xf32> to vector<1x8x1xf32>
    %47 = vector.broadcast %46 : vector<1x8x1xf32> to vector<1x8x8xf32>
    %48 = arith.subf %44, %47 : vector<1x8x8xf32>
    %49 = math.exp %48 : vector<1x8x8xf32>
    %cst_29 = arith.constant dense<0.000000e+00> : vector<1x8xf32>
    %50 = vector.multi_reduction <add>, %49, %cst_29 [2] : vector<1x8x8xf32> to vector<1x8xf32>
    %51 = vector.shape_cast %50 : vector<1x8xf32> to vector<1x8x1xf32>
    %52 = tpu.reciprocal %51 {approx = true} : vector<1x8x1xf32> -> vector<1x8x1xf32>
    %53 = vector.broadcast %52 : vector<1x8x1xf32> to vector<1x8x8xf32>
    %54 = arith.mulf %49, %53 : vector<1x8x8xf32>
    %55 = arith.truncf %54 : vector<1x8x8xf32> to vector<1x8x8xbf16>
    %56 = vector.extract_strided_slice %37 {offsets = [0, 0, 0], sizes = [1, 8, 16], strides = [1, 1, 1]} : vector<1x8x32xbf16> to vector<1x8x16xbf16>
    "tpu.trace_start"() <{level = 10 : i32, message = "bqk,bkd->bqd"}> : () -> ()
    %cst_30 = arith.constant dense<0.000000e+00> : vector<1x8x16xf32>
    %57 = tpu.matmul %55, %56, %cst_30 {dimension_numbers = #tpu.dot_dimension_numbers<[2], [1], [1], [2], [0, 0, 0, 1, 1, 2], [0], [0]>} : vector<1x8x8xbf16>, vector<1x8x16xbf16>, vector<1x8x16xf32> -> vector<1x8x16xf32>
    "tpu.trace_stop"() : () -> ()
    %c0_31 = arith.constant 0 : index
    %c0_32 = arith.constant 0 : index
    %c0_33 = arith.constant 0 : index
    %58 = vector.load %arg16[%c0_31, %c0_32, %c0_33] : memref<1x8x32xf32, #tpu.memory_space<vmem>>, vector<1x8x16xf32>
    tpu.vector_store %arg16[%c0_31, %c0_32, %c0_33], %57 {strides = array<i32>} : memref<1x8x32xf32, #tpu.memory_space<vmem>>, vector<1x8x16xf32>,
    %59 = vector.extract_strided_slice %25 {offsets = [0, 0, 16], sizes = [1, 8, 16], strides = [1, 1, 1]} : vector<1x8x32xbf16> to vector<1x8x16xbf16>
    %60 = vector.extract_strided_slice %31 {offsets = [0, 0, 16], sizes = [1, 8, 16], strides = [1, 1, 1]} : vector<1x8x32xbf16> to vector<1x8x16xbf16>
    "tpu.trace_start"() <{level = 10 : i32, message = "bqd,bkd->bqk"}> : () -> ()
    %cst_34 = arith.constant dense<0.000000e+00> : vector<1x8x8xf32>
    %61 = tpu.matmul %59, %60, %cst_34 {dimension_numbers = #tpu.dot_dimension_numbers<[2], [2], [1], [1], [0, 0, 0, 1, 1, 1], [0], [0]>} : vector<1x8x16xbf16>, vector<1x8x16xbf16>, vector<1x8x8xf32> -> vector<1x8x8xf32>
    "tpu.trace_stop"() : () -> ()
    %cst_35 = arith.constant 2.500000e-01 : f32
    %62 = vector.broadcast %cst_35 : f32 to vector<1x8x8xf32>
    %63 = arith.mulf %61, %62 : vector<1x8x8xf32>
    %64 = vector.broadcast %5 : vector<1x1x8xf32> to vector<1x8x8xf32>
    %65 = arith.addf %63, %64 : vector<1x8x8xf32>
    %cst_36 = arith.constant dense<0xFF800000> : vector<1x8xf32>
    %66 = vector.multi_reduction <maximumf>, %65, %cst_36 [2] : vector<1x8x8xf32> to vector<1x8xf32>
    %67 = vector.shape_cast %66 : vector<1x8xf32> to vector<1x8x1xf32>
    %68 = vector.broadcast %67 : vector<1x8x1xf32> to vector<1x8x8xf32>
    %69 = arith.subf %65, %68 : vector<1x8x8xf32>
    %70 = math.exp %69 : vector<1x8x8xf32>
    %cst_37 = arith.constant dense<0.000000e+00> : vector<1x8xf32>
    %71 = vector.multi_reduction <add>, %70, %cst_37 [2] : vector<1x8x8xf32> to vector<1x8xf32>
    %72 = vector.shape_cast %71 : vector<1x8xf32> to vector<1x8x1xf32>
    %73 = tpu.reciprocal %72 {approx = true} : vector<1x8x1xf32> -> vector<1x8x1xf32>
    %74 = vector.broadcast %73 : vector<1x8x1xf32> to vector<1x8x8xf32>
    %75 = arith.mulf %70, %74 : vector<1x8x8xf32>
    %76 = arith.truncf %75 : vector<1x8x8xf32> to vector<1x8x8xbf16>
    %77 = vector.extract_strided_slice %37 {offsets = [0, 0, 16], sizes = [1, 8, 16], strides = [1, 1, 1]} : vector<1x8x32xbf16> to vector<1x8x16xbf16>
    "tpu.trace_start"() <{level = 10 : i32, message = "bqk,bkd->bqd"}> : () -> ()
    %cst_38 = arith.constant dense<0.000000e+00> : vector<1x8x16xf32>
    %78 = tpu.matmul %76, %77, %cst_38 {dimension_numbers = #tpu.dot_dimension_numbers<[2], [1], [1], [2], [0, 0, 0, 1, 1, 2], [0], [0]>} : vector<1x8x8xbf16>, vector<1x8x16xbf16>, vector<1x8x16xf32> -> vector<1x8x16xf32>
    "tpu.trace_stop"() : () -> ()
    %c0_39 = arith.constant 0 : index
    %c0_40 = arith.constant 0 : index
    %c16 = arith.constant 16 : index
    %79 = vector.load %arg16[%c0_39, %c0_40, %c16] : memref<1x8x32xf32, #tpu.memory_space<vmem>>, vector<1x8x16xf32>
    tpu.vector_store %arg16[%c0_39, %c0_40, %c16], %78 {strides = array<i32>} : memref<1x8x32xf32, #tpu.memory_space<vmem>>, vector<1x8x16xf32>,
    %c0_41 = arith.constant 0 : index
    %c0_42 = arith.constant 0 : index
    %c0_43 = arith.constant 0 : index
    %80 = vector.load %arg16[%c0_41, %c0_42, %c0_43] : memref<1x8x32xf32, #tpu.memory_space<vmem>>, vector<1x8x32xf32>
    %81 = arith.truncf %80 : vector<1x8x32xf32> to vector<1x8x32xbf16>
    "tpu.trace_start"() <{level = 10 : i32, message = "bsh,hd->bsd"}> : () -> ()
    %cst_44 = arith.constant dense<0.000000e+00> : vector<1x8x32xf32>
    %82 = tpu.matmul %81, %9, %cst_44 {dimension_numbers = #tpu.dot_dimension_numbers<[2], [0], [0, 1], [1], [0, 0, 0, 1, 1, 1], [], []>} : vector<1x8x32xbf16>, vector<32x32xbf16>, vector<1x8x32xf32> -> vector<1x8x32xf32>
    "tpu.trace_stop"() : () -> ()
    %83 = vector.extract_strided_slice %15 {offsets = [3, 0], sizes = [1, 32], strides = [1, 1]} : vector<9x32xf32> to vector<1x32xf32>
    %84 = vector.shape_cast %83 : vector<1x32xf32> to vector<1x1x32xf32>
    %85 = vector.broadcast %84 : vector<1x1x32xf32> to vector<1x8x32xf32>
    %86 = arith.addf %82, %85 : vector<1x8x32xf32>
    %87 = arith.addf %86, %4 : vector<1x8x32xf32>
    %88 = vector.extract_strided_slice %15 {offsets = [4, 0], sizes = [1, 32], strides = [1, 1]} : vector<9x32xf32> to vector<1x32xf32>
    %89 = vector.extract_strided_slice %15 {offsets = [5, 0], sizes = [1, 32], strides = [1, 1]} : vector<9x32xf32> to vector<1x32xf32>
    %cst_45 = arith.constant dense<0.000000e+00> : vector<1x8xf32>
    %90 = vector.multi_reduction <add>, %87, %cst_45 [2] : vector<1x8x32xf32> to vector<1x8xf32>
    %91 = vector.shape_cast %90 : vector<1x8xf32> to vector<1x8x1xf32>
    %cst_46 = arith.constant 3.200000e+01 : f32
    %92 = vector.broadcast %cst_46 : f32 to vector<1x8x1xf32>
    %93 = arith.divf %91, %92 : vector<1x8x1xf32>
    %94 = vector.broadcast %93 : vector<1x8x1xf32> to vector<1x8x32xf32>
    %95 = arith.subf %87, %94 : vector<1x8x32xf32>
    %96 = arith.mulf %95, %95 : vector<1x8x32xf32>
    %cst_47 = arith.constant dense<0.000000e+00> : vector<1x8xf32>
    %97 = vector.multi_reduction <add>, %96, %cst_47 [2] : vector<1x8x32xf32> to vector<1x8xf32>
    %98 = vector.shape_cast %97 : vector<1x8xf32> to vector<1x8x1xf32>
    %cst_48 = arith.constant 3.200000e+01 : f32
    %99 = vector.broadcast %cst_48 : f32 to vector<1x8x1xf32>
    %100 = arith.divf %98, %99 : vector<1x8x1xf32>
    %101 = vector.broadcast %93 : vector<1x8x1xf32> to vector<1x8x32xf32>
    %102 = arith.subf %87, %101 : vector<1x8x32xf32>
    %cst_49 = arith.constant 9.99999996E-13 : f32
    %103 = vector.broadcast %cst_49 : f32 to vector<1x8x1xf32>
    %104 = arith.addf %100, %103 : vector<1x8x1xf32>
    %105 = math.rsqrt %104 : vector<1x8x1xf32>
    %106 = vector.broadcast %105 : vector<1x8x1xf32> to vector<1x8x32xf32>
    %107 = arith.mulf %102, %106 : vector<1x8x32xf32>
    %108 = vector.shape_cast %88 : vector<1x32xf32> to vector<1x1x32xf32>
    %109 = vector.broadcast %108 : vector<1x1x32xf32> to vector<1x8x32xf32>
    %110 = arith.mulf %107, %109 : vector<1x8x32xf32>
    %111 = vector.shape_cast %89 : vector<1x32xf32> to vector<1x1x32xf32>
    %112 = vector.broadcast %111 : vector<1x1x32xf32> to vector<1x8x32xf32>
    %113 = arith.addf %110, %112 : vector<1x8x32xf32>
    %114 = arith.truncf %113 : vector<1x8x32xf32> to vector<1x8x32xbf16>
    "tpu.trace_start"() <{level = 10 : i32, message = "bsh,hf->bsf"}> : () -> ()
    %cst_50 = arith.constant dense<0.000000e+00> : vector<1x8x128xf32>
    %115 = tpu.matmul %114, %11, %cst_50 {dimension_numbers = #tpu.dot_dimension_numbers<[2], [0], [0, 1], [1], [0, 0, 0, 1, 1, 1], [], []>} : vector<1x8x32xbf16>, vector<32x128xbf16>, vector<1x8x128xf32> -> vector<1x8x128xf32>
    "tpu.trace_stop"() : () -> ()
    %116 = vector.shape_cast %17 : vector<1x128xf32> to vector<1x1x128xf32>
    %117 = vector.broadcast %116 : vector<1x1x128xf32> to vector<1x8x128xf32>
    %118 = arith.addf %115, %117 : vector<1x8x128xf32>
    %119 = arith.mulf %118, %118 : vector<1x8x128xf32>
    %120 = arith.mulf %118, %119 : vector<1x8x128xf32>
    %cst_51 = arith.constant 4.471500e-02 : f32
    %121 = vector.broadcast %cst_51 : f32 to vector<1x8x128xf32>
    %122 = arith.mulf %121, %120 : vector<1x8x128xf32>
    %123 = arith.addf %118, %122 : vector<1x8x128xf32>
    %cst_52 = arith.constant 0.797884583 : f32
    %124 = vector.broadcast %cst_52 : f32 to vector<1x8x128xf32>
    %125 = arith.mulf %124, %123 : vector<1x8x128xf32>
    %126 = math.tanh %125 : vector<1x8x128xf32>
    %cst_53 = arith.constant 1.000000e+00 : f32
    %127 = vector.broadcast %cst_53 : f32 to vector<1x8x128xf32>
    %128 = arith.addf %127, %126 : vector<1x8x128xf32>
    %cst_54 = arith.constant 5.000000e-01 : f32
    %129 = vector.broadcast %cst_54 : f32 to vector<1x8x128xf32>
    %130 = arith.mulf %129, %128 : vector<1x8x128xf32>
    %131 = arith.mulf %118, %130 : vector<1x8x128xf32>
    %132 = arith.truncf %131 : vector<1x8x128xf32> to vector<1x8x128xbf16>
    "tpu.trace_start"() <{level = 10 : i32, message = "bsf,fh->bsh"}> : () -> ()
    %cst_55 = arith.constant dense<0.000000e+00> : vector<1x8x32xf32>
    %133 = tpu.matmul %132, %13, %cst_55 {dimension_numbers = #tpu.dot_dimension_numbers<[2], [0], [0, 1], [1], [0, 0, 0, 1, 1, 1], [], []>} : vector<1x8x128xbf16>, vector<128x32xbf16>, vector<1x8x32xf32> -> vector<1x8x32xf32>
    "tpu.trace_stop"() : () -> ()
    %134 = vector.extract_strided_slice %15 {offsets = [6, 0], sizes = [1, 32], strides = [1, 1]} : vector<9x32xf32> to vector<1x32xf32>
    %135 = vector.shape_cast %134 : vector<1x32xf32> to vector<1x1x32xf32>
    %136 = vector.broadcast %135 : vector<1x1x32xf32> to vector<1x8x32xf32>
    %137 = arith.addf %133, %136 : vector<1x8x32xf32>
    %138 = arith.addf %137, %113 : vector<1x8x32xf32>
    %139 = vector.extract_strided_slice %15 {offsets = [7, 0], sizes = [1, 32], strides = [1, 1]} : vector<9x32xf32> to vector<1x32xf32>
    %140 = vector.extract_strided_slice %15 {offsets = [8, 0], sizes = [1, 32], strides = [1, 1]} : vector<9x32xf32> to vector<1x32xf32>
    %cst_56 = arith.constant dense<0.000000e+00> : vector<1x8xf32>
    %141 = vector.multi_reduction <add>, %138, %cst_56 [2] : vector<1x8x32xf32> to vector<1x8xf32>
    %142 = vector.shape_cast %141 : vector<1x8xf32> to vector<1x8x1xf32>
    %cst_57 = arith.constant 3.200000e+01 : f32
    %143 = vector.broadcast %cst_57 : f32 to vector<1x8x1xf32>
    %144 = arith.divf %142, %143 : vector<1x8x1xf32>
    %145 = vector.broadcast %144 : vector<1x8x1xf32> to vector<1x8x32xf32>
    %146 = arith.subf %138, %145 : vector<1x8x32xf32>
    %147 = arith.mulf %146, %146 : vector<1x8x32xf32>
    %cst_58 = arith.constant dense<0.000000e+00> : vector<1x8xf32>
    %148 = vector.multi_reduction <add>, %147, %cst_58 [2] : vector<1x8x32xf32> to vector<1x8xf32>
    %149 = vector.shape_cast %148 : vector<1x8xf32> to vector<1x8x1xf32>
    %cst_59 = arith.constant 3.200000e+01 : f32
    %150 = vector.broadcast %cst_59 : f32 to vector<1x8x1xf32>
    %151 = arith.divf %149, %150 : vector<1x8x1xf32>
    %152 = vector.broadcast %144 : vector<1x8x1xf32> to vector<1x8x32xf32>
    %153 = arith.subf %138, %152 : vector<1x8x32xf32>
    %cst_60 = arith.constant 9.99999996E-13 : f32
    %154 = vector.broadcast %cst_60 : f32 to vector<1x8x1xf32>
    %155 = arith.addf %151, %154 : vector<1x8x1xf32>
    %156 = math.rsqrt %155 : vector<1x8x1xf32>
    %157 = vector.broadcast %156 : vector<1x8x1xf32> to vector<1x8x32xf32>
    %158 = arith.mulf %153, %157 : vector<1x8x32xf32>
    %159 = vector.shape_cast %139 : vector<1x32xf32> to vector<1x1x32xf32>
    %160 = vector.broadcast %159 : vector<1x1x32xf32> to vector<1x8x32xf32>
    %161 = arith.mulf %158, %160 : vector<1x8x32xf32>
    %162 = vector.shape_cast %140 : vector<1x32xf32> to vector<1x1x32xf32>
    %163 = vector.broadcast %162 : vector<1x1x32xf32> to vector<1x8x32xf32>
    %164 = arith.addf %161, %163 : vector<1x8x32xf32>
    %c0_61 = arith.constant 0 : index
    %c0_62 = arith.constant 0 : index
    %c0_63 = arith.constant 0 : index
    %165 = vector.load %arg15[%c0_61, %c0_62, %c0_63] : memref<1x8x32xf32, #tpu.memory_space<vmem>>, vector<1x8x32xf32>
    tpu.vector_store %arg15[%c0_61, %c0_62, %c0_63], %164 {strides = array<i32>} : memref<1x8x32xf32, #tpu.memory_space<vmem>>, vector<1x8x32xf32>,
    %c1_i32 = arith.constant 1 : i32
    %166 = arith.cmpi eq, %arg1, %c1_i32 : i32
    %167 = arith.extui %166 : i1 to i32
    %c0_i32_64 = arith.constant 0 : i32
    %168 = arith.cmpi ne, %167, %c0_i32_64 : i32
    scf.if %168 {
      %169 = vector.extract_strided_slice %164 {offsets = [0, 0, 0], sizes = [1, 1, 32], strides = [1, 1, 1]} : vector<1x8x32xf32> to vector<1x1x32xf32>
      %170 = vector.shape_cast %169 : vector<1x1x32xf32> to vector<1x32xf32>
      %171 = vector.extract_strided_slice %0 {offsets = [2, 0], sizes = [1, 32], strides = [1, 1]} : vector<7x32xf32> to vector<1x32xf32>
      %172 = vector.extract_strided_slice %0 {offsets = [3, 0], sizes = [1, 32], strides = [1, 1]} : vector<7x32xf32> to vector<1x32xf32>
      %c0_65 = arith.constant 0 : index
      %c0_66 = arith.constant 0 : index
      %173 = vector.load %arg11[%c0_65, %c0_66] : memref<32x32xbf16, #tpu.memory_space<vmem>>, vector<32x32xbf16>
      %174 = vector.extract_strided_slice %0 {offsets = [4, 0], sizes = [1, 32], strides = [1, 1]} : vector<7x32xf32> to vector<1x32xf32>
      %175 = vector.extract_strided_slice %0 {offsets = [5, 0], sizes = [1, 32], strides = [1, 1]} : vector<7x32xf32> to vector<1x32xf32>
      %176 = vector.extract_strided_slice %0 {offsets = [6, 0], sizes = [1, 32], strides = [1, 1]} : vector<7x32xf32> to vector<1x32xf32>
      %c0_67 = arith.constant 0 : index
      %c0_68 = arith.constant 0 : index
      %177 = vector.load %arg12[%c0_67, %c0_68] : memref<32x8xf32, #tpu.memory_space<vmem>>, vector<32x8xf32>
      %c0_69 = arith.constant 0 : index
      %c0_70 = arith.constant 0 : index
      %178 = vector.load %arg13[%c0_69, %c0_70] : memref<1x8xf32, #tpu.memory_space<vmem>>, vector<1x8xf32>
      %cst_71 = arith.constant dense<0.000000e+00> : vector<1xf32>
      %179 = vector.multi_reduction <add>, %170, %cst_71 [1] : vector<1x32xf32> to vector<1xf32>
      %180 = vector.shape_cast %179 : vector<1xf32> to vector<1x1xf32>
      %cst_72 = arith.constant 3.200000e+01 : f32
      %181 = vector.broadcast %cst_72 : f32 to vector<1x1xf32>
      %182 = arith.divf %180, %181 : vector<1x1xf32>
      %183 = vector.broadcast %182 : vector<1x1xf32> to vector<1x32xf32>
      %184 = arith.subf %170, %183 : vector<1x32xf32>
      %185 = arith.mulf %184, %184 : vector<1x32xf32>
      %cst_73 = arith.constant dense<0.000000e+00> : vector<1xf32>
      %186 = vector.multi_reduction <add>, %185, %cst_73 [1] : vector<1x32xf32> to vector<1xf32>
      %187 = vector.shape_cast %186 : vector<1xf32> to vector<1x1xf32>
      %cst_74 = arith.constant 3.200000e+01 : f32
      %188 = vector.broadcast %cst_74 : f32 to vector<1x1xf32>
      %189 = arith.divf %187, %188 : vector<1x1xf32>
      %190 = vector.broadcast %182 : vector<1x1xf32> to vector<1x32xf32>
      %191 = arith.subf %170, %190 : vector<1x32xf32>
      %cst_75 = arith.constant 9.99999974E-6 : f32
      %192 = vector.broadcast %cst_75 : f32 to vector<1x1xf32>
      %193 = arith.addf %189, %192 : vector<1x1xf32>
      %194 = math.rsqrt %193 : vector<1x1xf32>
      %195 = vector.broadcast %194 : vector<1x1xf32> to vector<1x32xf32>
      %196 = arith.mulf %191, %195 : vector<1x32xf32>
      %197 = arith.mulf %196, %171 : vector<1x32xf32>
      %198 = arith.addf %197, %172 : vector<1x32xf32>
      %199 = arith.truncf %198 : vector<1x32xf32> to vector<1x32xbf16>
      %cst_76 = arith.constant dense<0.000000e+00> : vector<1x32xf32>
      %200 = tpu.matmul %199, %173, %cst_76 {dimension_numbers = #tpu.dot_dimension_numbers<[1], [0], [0], [1], [0, 0, 1, 1], [], []>} : vector<1x32xbf16>, vector<32x32xbf16>, vector<1x32xf32> -> vector<1x32xf32>
      %201 = arith.addf %200, %174 : vector<1x32xf32>
      %cst_77 = arith.constant 0.000000e+00 : f32
      %202 = vector.broadcast %cst_77 : f32 to vector<1x32xf32>
      %203 = arith.maximumf %201, %202 : vector<1x32xf32>
      %cst_78 = arith.constant dense<0.000000e+00> : vector<1xf32>
      %204 = vector.multi_reduction <add>, %203, %cst_78 [1] : vector<1x32xf32> to vector<1xf32>
      %205 = vector.shape_cast %204 : vector<1xf32> to vector<1x1xf32>
      %cst_79 = arith.constant 3.200000e+01 : f32
      %206 = vector.broadcast %cst_79 : f32 to vector<1x1xf32>
      %207 = arith.divf %205, %206 : vector<1x1xf32>
      %208 = vector.broadcast %207 : vector<1x1xf32> to vector<1x32xf32>
      %209 = arith.subf %203, %208 : vector<1x32xf32>
      %210 = arith.mulf %209, %209 : vector<1x32xf32>
      %cst_80 = arith.constant dense<0.000000e+00> : vector<1xf32>
      %211 = vector.multi_reduction <add>, %210, %cst_80 [1] : vector<1x32xf32> to vector<1xf32>
      %212 = vector.shape_cast %211 : vector<1xf32> to vector<1x1xf32>
      %cst_81 = arith.constant 3.200000e+01 : f32
      %213 = vector.broadcast %cst_81 : f32 to vector<1x1xf32>
      %214 = arith.divf %212, %213 : vector<1x1xf32>
      %215 = vector.broadcast %207 : vector<1x1xf32> to vector<1x32xf32>
      %216 = arith.subf %203, %215 : vector<1x32xf32>
      %cst_82 = arith.constant 9.99999974E-6 : f32
      %217 = vector.broadcast %cst_82 : f32 to vector<1x1xf32>
      %218 = arith.addf %214, %217 : vector<1x1xf32>
      %219 = math.rsqrt %218 : vector<1x1xf32>
      %220 = vector.broadcast %219 : vector<1x1xf32> to vector<1x32xf32>
      %221 = arith.mulf %216, %220 : vector<1x32xf32>
      %222 = arith.mulf %221, %175 : vector<1x32xf32>
      %223 = arith.addf %222, %176 : vector<1x32xf32>
      %cst_83 = arith.constant dense<0.000000e+00> : vector<1x8xf32>
      %224 = tpu.matmul %223, %177, %cst_83 {dimension_numbers = #tpu.dot_dimension_numbers<[1], [0], [0], [1], [0, 0, 1, 1], [], []>} : vector<1x32xf32>, vector<32x8xf32>, vector<1x8xf32> -> vector<1x8xf32>
      %225 = arith.addf %224, %178 : vector<1x8xf32>
      %226 = arith.negf %225 : vector<1x8xf32>
      %227 = math.exp %226 : vector<1x8xf32>
      %cst_84 = arith.constant 1.000000e+00 : f32
      %228 = vector.broadcast %cst_84 : f32 to vector<1x8xf32>
      %229 = arith.addf %228, %227 : vector<1x8xf32>
      %230 = arith.divf %228, %229 : vector<1x8xf32>
      %231 = vector.shape_cast %230 : vector<1x8xf32> to vector<1x1x8xf32>
      %c0_85 = arith.constant 0 : index
      %c0_86 = arith.constant 0 : index
      %c0_87 = arith.constant 0 : index
      %232 = vector.load %arg14[%c0_85, %c0_86, %c0_87] : memref<1x1x8xf32, #tpu.memory_space<vmem>>, vector<1x1x8xf32>
      tpu.vector_store %arg14[%c0_85, %c0_86, %c0_87], %231 {strides = array<i32>} : memref<1x1x8xf32, #tpu.memory_space<vmem>>, vector<1x1x8xf32>,
    } else {
    }
    return
  }
  func.func @transform_0(%arg0: i32, %arg1: i32) -> (i32, i32, i32) {
    %c0_i32 = arith.constant 0 : i32
    %c0_i32_0 = arith.constant 0 : i32
    %c0_i32_1 = arith.constant 0 : i32
    return %arg0, %c0_i32, %c0_i32_0 : i32, i32, i32
  }
  func.func @transform_1(%arg0: i32, %arg1: i32) -> (i32, i32, i32) {
    %c0_i32 = arith.constant 0 : i32
    %c0_i32_0 = arith.constant 0 : i32
    %c0_i32_1 = arith.constant 0 : i32
    return %arg0, %c0_i32, %c0_i32_0 : i32, i32, i32
  }
  func.func @transform_2(%arg0: i32, %arg1: i32) -> (i32, i32, i32) {
    %c0_i32 = arith.constant 0 : i32
    %c0_i32_0 = arith.constant 0 : i32
    %c0_i32_1 = arith.constant 0 : i32
    return %arg1, %c0_i32, %c0_i32_0 : i32, i32, i32
  }
  func.func @transform_3(%arg0: i32, %arg1: i32) -> (i32, i32, i32) {
    %c0_i32 = arith.constant 0 : i32
    %c0_i32_0 = arith.constant 0 : i32
    %c0_i32_1 = arith.constant 0 : i32
    return %arg1, %c0_i32, %c0_i32_0 : i32, i32, i32
  }
  func.func @transform_4(%arg0: i32, %arg1: i32) -> (i32, i32, i32) {
    %c0_i32 = arith.constant 0 : i32
    %c0_i32_0 = arith.constant 0 : i32
    %c0_i32_1 = arith.constant 0 : i32
    return %arg1, %c0_i32, %c0_i32_0 : i32, i32, i32
  }
  func.func @transform_5(%arg0: i32, %arg1: i32) -> (i32, i32, i32) {
    %c0_i32 = arith.constant 0 : i32
    %c0_i32_0 = arith.constant 0 : i32
    %c0_i32_1 = arith.constant 0 : i32
    return %arg1, %c0_i32, %c0_i32_0 : i32, i32, i32
  }
  func.func @transform_6(%arg0: i32, %arg1: i32) -> (i32, i32, i32) {
    %c0_i32 = arith.constant 0 : i32
    %c0_i32_0 = arith.constant 0 : i32
    %c0_i32_1 = arith.constant 0 : i32
    return %arg1, %c0_i32, %c0_i32_0 : i32, i32, i32
  }
  func.func @transform_7(%arg0: i32, %arg1: i32) -> (i32, i32, i32) {
    %c0_i32 = arith.constant 0 : i32
    %c0_i32_0 = arith.constant 0 : i32
    %c0_i32_1 = arith.constant 0 : i32
    return %arg1, %c0_i32, %c0_i32_0 : i32, i32, i32
  }
  func.func @transform_8(%arg0: i32, %arg1: i32) -> (i32, i32) {
    %c0_i32 = arith.constant 0 : i32
    %c0_i32_0 = arith.constant 0 : i32
    %c0_i32_1 = arith.constant 0 : i32
    return %c0_i32, %c0_i32_0 : i32, i32
  }
  func.func @transform_9(%arg0: i32, %arg1: i32) -> (i32, i32) {
    %c0_i32 = arith.constant 0 : i32
    %c0_i32_0 = arith.constant 0 : i32
    %c0_i32_1 = arith.constant 0 : i32
    return %c0_i32, %c0_i32_0 : i32, i32
  }
  func.func @transform_10(%arg0: i32, %arg1: i32) -> (i32, i32) {
    %c0_i32 = arith.constant 0 : i32
    %c0_i32_0 = arith.constant 0 : i32
    %c0_i32_1 = arith.constant 0 : i32
    return %c0_i32, %c0_i32_0 : i32, i32
  }
  func.func @transform_11(%arg0: i32, %arg1: i32) -> (i32, i32) {
    %c0_i32 = arith.constant 0 : i32
    %c0_i32_0 = arith.constant 0 : i32
    %c0_i32_1 = arith.constant 0 : i32
    return %c0_i32, %c0_i32_0 : i32, i32
  }
  func.func @transform_12(%arg0: i32, %arg1: i32) -> (i32, i32, i32) {
    %c0_i32 = arith.constant 0 : i32
    %c0_i32_0 = arith.constant 0 : i32
    %c0_i32_1 = arith.constant 0 : i32
    return %arg0, %c0_i32, %c0_i32_0 : i32, i32, i32
  }
}

</mosaic_0001>

<llo_original>
// kernel: tpu_custom_call.1
$region0: #{tpu_custom_call.1}
  #allocation0 [shape = 'u32[]', space=smem, size = 0x4, offset = 0x4, fixed_abs, tag = 'smem constant byte address 0x4 - core index']
  #allocation1 [shape = 'u32[144,128]{1,0:T(1,128)}', space=vmem, size = 0x12000, scoped, tag = 'internal scratch']
  #allocation2 [shape = 'f32[1,8,32]{2,1,0:T(8,128)}', space=vmem, size = 0x1000, scoped, tag = 'scratch operand']
  #allocation3 [shape = 'f32[1,8,32]{2,1,0:T(8,128)}', space=vmem, size = 0x1000, scoped, tag = 'scratch operand']
  %s0 = inlined_call_operand.vmem [shape: f32[2,8,32], index: 0, kind: input, shape index: {}]
  %s1 = inlined_call_operand.vmem [shape: f32[2,1,8], index: 1, kind: input, shape index: {}]
  %s2 = inlined_call_operand.vmem [shape: bf16[2,32,96], index: 2, kind: input, shape index: {}]
  %s3 = inlined_call_operand.vmem [shape: bf16[2,32,32], index: 3, kind: input, shape index: {}]
  %s4 = inlined_call_operand.vmem [shape: bf16[2,32,128], index: 4, kind: input, shape index: {}]
  %s5 = inlined_call_operand.vmem [shape: bf16[2,128,32], index: 5, kind: input, shape index: {}]
  %s6 = inlined_call_operand.vmem [shape: f32[2,9,32], index: 6, kind: input, shape index: {}]
  %s7 = inlined_call_operand.vmem [shape: f32[2,1,128], index: 7, kind: input, shape index: {}]
  %s8 = inlined_call_operand.vmem [shape: f32[7,32], index: 8, kind: input, shape index: {}]
  %s9 = inlined_call_operand.vmem [shape: bf16[32,32], index: 9, kind: input, shape index: {}]
  %s10 = inlined_call_operand.vmem [shape: f32[32,8], index: 10, kind: input, shape index: {}]
  %s11 = inlined_call_operand.vmem [shape: f32[1,8], index: 11, kind: input, shape index: {}]
  %s12 = inlined_call_operand.hbm [shape: f32[2,1,8], index: 12, kind: output, shape index: {}]
  %s13 = sld [smem:[#allocation0]]
  $region89: #{tpu_custom_call.1} parent=0
    _
  %s15 = ssub.s32 1, %s13
  %s16 = scalar_select 0, %s15, %s13
  $region1: #{tpu_custom_call.1} parent=0
    #allocation4 [shape = 'u8[1024]{0}', space=vmem, size = 0x400, scoped, tag = 'output window, operand 0']
    #allocation5 [shape = 's32[2]{0}', space=sflag, size = 0x8, scoped, tag = 'scoped memory for tpu_custom_call.1']
    %17 = vsyncpa [#allocation5], 0
    %s18 = scalar_lea.sflag [#allocation5], 1
    %19 = vsyncpa %s18, 0
    loop: start=0, step=1, limit=6
    $region2: #{tpu_custom_call.1} parent=1 // loop_pre_header
      _
    $region3: #{tpu_custom_call.1} parent=1 // loop_header
      %s21 = sphi 0, %s25
      %p22 = scmp.ge.s32.totalorder %s21, 6
      %s28 = sphi 0, %s40
      %s29 = sphi 0, %s36
      %s30 = sphi 0, %s28
      %s31 = sphi 0, %s29
      %s32 = sphi 0, %s30
      %s33 = sphi 0, %s31
      %s43 = sphi 0, %s45
      %s46 = sphi 0, %s43
      %s47 = sphi 0, %s46
      %s63 = sphi 0, %s47
      %s69 = sphi 0, %s71
      %s72 = sphi 0, %s69
      %s73 = sphi 0, %s72
      %s89 = sphi 0, %s73
      %s95 = sphi 0, %s97
      %s98 = sphi 0, %s95
      %s99 = sphi 0, %s98
      %s115 = sphi 0, %s99
      %s121 = sphi 0, %s123
      %s124 = sphi 0, %s121
      %s125 = sphi 0, %s124
      %s141 = sphi 0, %s125
      %s147 = sphi 0, %s149
      %s150 = sphi 0, %s147
      %s151 = sphi 0, %s150
      %s167 = sphi 0, %s151
      %s173 = sphi 0, %s175
      %s176 = sphi 0, %s173
      %s177 = sphi 0, %s176
      %s193 = sphi 0, %s177
      %s199 = sphi 0, %s201
      %s202 = sphi 0, %s199
      %s203 = sphi 0, %s202
      %s219 = sphi 0, %s203
      %s225 = sphi 0, %s227
      %s228 = sphi 0, %s225
      %s229 = sphi 0, %s228
      %s245 = sphi 0, %s229
      %s249 = sphi 0, %s249
      %s251 = sphi 0, %s249
      %s252 = sphi 0, %s251
      %s266 = sphi 0, %s252
      %s270 = sphi 0, %s270
      %s272 = sphi 0, %s270
      %s273 = sphi 0, %s272
      %s287 = sphi 0, %s273
      %s291 = sphi 0, %s291
      %s293 = sphi 0, %s291
      %s294 = sphi 0, %s293
      %s308 = sphi 0, %s294
      %s312 = sphi 0, %s312
      %s314 = sphi 0, %s312
      %s315 = sphi 0, %s314
      %s329 = sphi 0, %s315
      %s335 = sphi 0, %s337
      %s338 = sphi 0, %s335
      %s339 = sphi 0, %s338
      %s355 = sphi 0, %s339
    $region4: #{tpu_custom_call.1} parent=1 // loop_header_branch
      %24 = sbr.rel (%p22) target = $region8
    $region5: #{tpu_custom_call.1} parent=1 // loop_body
      %s26 = ssub.s32 %s21, 1
      %s27 = ssub.s32 %s21, 2
      %s34 = sadd.s32 1, %s29
      %p35 = scmp.ge.s32.totalorder %s34, 2
      %s36 = scalar_select %p35, 0, %s34
      %s37 = sadd.s32 1, %s28
      %s38 = scalar_select %p35, %s37, %s28
      %p39 = scmp.ge.s32.totalorder %s38, 2
      %s40 = scalar_select %p39, 0, %s38
      %s41 = ssub.s32 %s28, %s40
      %p42 = scmp.eq.s32.totalorder %s41, 0
      %s44 = sadd.s32 %s43, 1
      %s45 = scalar_select %p42, %s43, %s44
      %p48 = pneg %p42
      %p49 = scmp.eq.s32.totalorder %s21, 3
      %p50 = por %p48, %p49
      %p51 = scmp.ne.s32.totalorder %s43, %s46
      %p52 = scmp.eq.s32.totalorder %s21, 0
      %p53 = por %p51, %p52
      %p54 = scmp.ne.s32.totalorder %s43, %s46
      %p55 = scmp.eq.s32.totalorder %s26, 3
      %p56 = por %p54, %p55
      %p57 = scmp.ne.s32.totalorder %s46, %s47
      %p58 = scmp.eq.s32.totalorder %s26, 0
      %p59 = por %p57, %p58
      %p60 = scmp.ne.s32.totalorder %s46, %s47
      %p61 = scmp.eq.s32.totalorder %s27, 3
      %p62 = por %p60, %p61
      %p64 = scmp.ne.s32.totalorder %s47, %s63
      %p65 = scmp.eq.s32.totalorder %s27, 0
      %p66 = por %p64, %p65
      %s67 = ssub.s32 %s28, %s40
      %p68 = scmp.eq.s32.totalorder %s67, 0
      %s70 = sadd.s32 %s69, 1
      %s71 = scalar_select %p68, %s69, %s70
      %p74 = pneg %p68
      %p75 = scmp.eq.s32.totalorder %s21, 3
      %p76 = por %p74, %p75
      %p77 = scmp.ne.s32.totalorder %s69, %s72
      %p78 = scmp.eq.s32.totalorder %s21, 0
      %p79 = por %p77, %p78
      %p80 = scmp.ne.s32.totalorder %s69, %s72
      %p81 = scmp.eq.s32.totalorder %s26, 3
      %p82 = por %p80, %p81
      %p83 = scmp.ne.s32.totalorder %s72, %s73
      %p84 = scmp.eq.s32.totalorder %s26, 0
      %p85 = por %p83, %p84
      %p86 = scmp.ne.s32.totalorder %s72, %s73
      %p87 = scmp.eq.s32.totalorder %s27, 3
      %p88 = por %p86, %p87
      %p90 = scmp.ne.s32.totalorder %s73, %s89
      %p91 = scmp.eq.s32.totalorder %s27, 0
      %p92 = por %p90, %p91
      %s93 = ssub.s32 %s29, %s36
      %p94 = scmp.eq.s32.totalorder %s93, 0
      %s96 = sadd.s32 %s95, 1
      %s97 = scalar_select %p94, %s95, %s96
      %p100 = pneg %p94
      %p101 = scmp.eq.s32.totalorder %s21, 3
      %p102 = por %p100, %p101
      %p103 = scmp.ne.s32.totalorder %s95, %s98
      %p104 = scmp.eq.s32.totalorder %s21, 0
      %p105 = por %p103, %p104
      %p106 = scmp.ne.s32.totalorder %s95, %s98
      %p107 = scmp.eq.s32.totalorder %s26, 3
      %p108 = por %p106, %p107
      %p109 = scmp.ne.s32.totalorder %s98, %s99
      %p110 = scmp.eq.s32.totalorder %s26, 0
      %p111 = por %p109, %p110
      %p112 = scmp.ne.s32.totalorder %s98, %s99
      %p113 = scmp.eq.s32.totalorder %s27, 3
      %p114 = por %p112, %p113
      %p116 = scmp.ne.s32.totalorder %s99, %s115
      %p117 = scmp.eq.s32.totalorder %s27, 0
      %p118 = por %p116, %p117
      %s119 = ssub.s32 %s29, %s36
      %p120 = scmp.eq.s32.totalorder %s119, 0
      %s122 = sadd.s32 %s121, 1
      %s123 = scalar_select %p120, %s121, %s122
      %p126 = pneg %p120
      %p127 = scmp.eq.s32.totalorder %s21, 3
      %p128 = por %p126, %p127
      %p129 = scmp.ne.s32.totalorder %s121, %s124
      %p130 = scmp.eq.s32.totalorder %s21, 0
      %p131 = por %p129, %p130
      %p132 = scmp.ne.s32.totalorder %s121, %s124
      %p133 = scmp.eq.s32.totalorder %s26, 3
      %p134 = por %p132, %p133
      %p135 = scmp.ne.s32.totalorder %s124, %s125
      %p136 = scmp.eq.s32.totalorder %s26, 0
      %p137 = por %p135, %p136
      %p138 = scmp.ne.s32.totalorder %s124, %s125
      %p139 = scmp.eq.s32.totalorder %s27, 3
      %p140 = por %p138, %p139
      %p142 = scmp.ne.s32.totalorder %s125, %s141
      %p143 = scmp.eq.s32.totalorder %s27, 0
      %p144 = por %p142, %p143
      %s145 = ssub.s32 %s29, %s36
      %p146 = scmp.eq.s32.totalorder %s145, 0
      %s148 = sadd.s32 %s147, 1
      %s149 = scalar_select %p146, %s147, %s148
      %p152 = pneg %p146
      %p153 = scmp.eq.s32.totalorder %s21, 3
      %p154 = por %p152, %p153
      %p155 = scmp.ne.s32.totalorder %s147, %s150
      %p156 = scmp.eq.s32.totalorder %s21, 0
      %p157 = por %p155, %p156
      %p158 = scmp.ne.s32.totalorder %s147, %s150
      %p159 = scmp.eq.s32.totalorder %s26, 3
      %p160 = por %p158, %p159
      %p161 = scmp.ne.s32.totalorder %s150, %s151
      %p162 = scmp.eq.s32.totalorder %s26, 0
      %p163 = por %p161, %p162
      %p164 = scmp.ne.s32.totalorder %s150, %s151
      %p165 = scmp.eq.s32.totalorder %s27, 3
      %p166 = por %p164, %p165
      %p168 = scmp.ne.s32.totalorder %s151, %s167
      %p169 = scmp.eq.s32.totalorder %s27, 0
      %p170 = por %p168, %p169
      %s171 = ssub.s32 %s29, %s36
      %p172 = scmp.eq.s32.totalorder %s171, 0
      %s174 = sadd.s32 %s173, 1
      %s175 = scalar_select %p172, %s173, %s174
      %p178 = pneg %p172
      %p179 = scmp.eq.s32.totalorder %s21, 3
      %p180 = por %p178, %p179
      %p181 = scmp.ne.s32.totalorder %s173, %s176
      %p182 = scmp.eq.s32.totalorder %s21, 0
      %p183 = por %p181, %p182
      %p184 = scmp.ne.s32.totalorder %s173, %s176
      %p185 = scmp.eq.s32.totalorder %s26, 3
      %p186 = por %p184, %p185
      %p187 = scmp.ne.s32.totalorder %s176, %s177
      %p188 = scmp.eq.s32.totalorder %s26, 0
      %p189 = por %p187, %p188
      %p190 = scmp.ne.s32.totalorder %s176, %s177
      %p191 = scmp.eq.s32.totalorder %s27, 3
      %p192 = por %p190, %p191
      %p194 = scmp.ne.s32.totalorder %s177, %s193
      %p195 = scmp.eq.s32.totalorder %s27, 0
      %p196 = por %p194, %p195
      %s197 = ssub.s32 %s29, %s36
      %p198 = scmp.eq.s32.totalorder %s197, 0
      %s200 = sadd.s32 %s199, 1
      %s201 = scalar_select %p198, %s199, %s200
      %p204 = pneg %p198
      %p205 = scmp.eq.s32.totalorder %s21, 3
      %p206 = por %p204, %p205
      %p207 = scmp.ne.s32.totalorder %s199, %s202
      %p208 = scmp.eq.s32.totalorder %s21, 0
      %p209 = por %p207, %p208
      %p210 = scmp.ne.s32.totalorder %s199, %s202
      %p211 = scmp.eq.s32.totalorder %s26, 3
      %p212 = por %p210, %p211
      %p213 = scmp.ne.s32.totalorder %s202, %s203
      %p214 = scmp.eq.s32.totalorder %s26, 0
      %p215 = por %p213, %p214
      %p216 = scmp.ne.s32.totalorder %s202, %s203
      %p217 = scmp.eq.s32.totalorder %s27, 3
      %p218 = por %p216, %p217
      %p220 = scmp.ne.s32.totalorder %s203, %s219
      %p221 = scmp.eq.s32.totalorder %s27, 0
      %p222 = por %p220, %p221
      %s223 = ssub.s32 %s29, %s36
      %p224 = scmp.eq.s32.totalorder %s223, 0
      %s226 = sadd.s32 %s225, 1
      %s227 = scalar_select %p224, %s225, %s226
      %p230 = pneg %p224
      %p231 = scmp.eq.s32.totalorder %s21, 3
      %p232 = por %p230, %p231
      %p233 = scmp.ne.s32.totalorder %s225, %s228
      %p234 = scmp.eq.s32.totalorder %s21, 0
      %p235 = por %p233, %p234
      %p236 = scmp.ne.s32.totalorder %s225, %s228
      %p237 = scmp.eq.s32.totalorder %s26, 3
      %p238 = por %p236, %p237
      %p239 = scmp.ne.s32.totalorder %s228, %s229
      %p240 = scmp.eq.s32.totalorder %s26, 0
      %p241 = por %p239, %p240
      %p242 = scmp.ne.s32.totalorder %s228, %s229
      %p243 = scmp.eq.s32.totalorder %s27, 3
      %p244 = por %p242, %p243
      %p246 = scmp.ne.s32.totalorder %s229, %s245
      %p247 = scmp.eq.s32.totalorder %s27, 0
      %p248 = por %p246, %p247
      %s250 = sadd.s32 %s249, 1
      %p253 = scmp.eq.s32.totalorder %s21, 3
      %p254 = scmp.ne.s32.totalorder %s249, %s251
      %p255 = scmp.eq.s32.totalorder %s21, 0
      %p256 = por %p254, %p255
      %p257 = scmp.ne.s32.totalorder %s249, %s251
      %p258 = scmp.eq.s32.totalorder %s26, 3
      %p259 = por %p257, %p258
      %p260 = scmp.ne.s32.totalorder %s251, %s252
      %p261 = scmp.eq.s32.totalorder %s26, 0
      %p262 = por %p260, %p261
      %p263 = scmp.ne.s32.totalorder %s251, %s252
      %p264 = scmp.eq.s32.totalorder %s27, 3
      %p265 = por %p263, %p264
      %p267 = scmp.ne.s32.totalorder %s252, %s266
      %p268 = scmp.eq.s32.totalorder %s27, 0
      %p269 = por %p267, %p268
      %s271 = sadd.s32 %s270, 1
      %p274 = scmp.eq.s32.totalorder %s21, 3
      %p275 = scmp.ne.s32.totalorder %s270, %s272
      %p276 = scmp.eq.s32.totalorder %s21, 0
      %p277 = por %p275, %p276
      %p278 = scmp.ne.s32.totalorder %s270, %s272
      %p279 = scmp.eq.s32.totalorder %s26, 3
      %p280 = por %p278, %p279
      %p281 = scmp.ne.s32.totalorder %s272, %s273
      %p282 = scmp.eq.s32.totalorder %s26, 0
      %p283 = por %p281, %p282
      %p284 = scmp.ne.s32.totalorder %s272, %s273
      %p285 = scmp.eq.s32.totalorder %s27, 3
      %p286 = por %p284, %p285
      %p288 = scmp.ne.s32.totalorder %s273, %s287
      %p289 = scmp.eq.s32.totalorder %s27, 0
      %p290 = por %p288, %p289
      %s292 = sadd.s32 %s291, 1
      %p295 = scmp.eq.s32.totalorder %s21, 3
      %p296 = scmp.ne.s32.totalorder %s291, %s293
      %p297 = scmp.eq.s32.totalorder %s21, 0
      %p298 = por %p296, %p297
      %p299 = scmp.ne.s32.totalorder %s291, %s293
      %p300 = scmp.eq.s32.totalorder %s26, 3
      %p301 = por %p299, %p300
      %p302 = scmp.ne.s32.totalorder %s293, %s294
      %p303 = scmp.eq.s32.totalorder %s26, 0
      %p304 = por %p302, %p303
      %p305 = scmp.ne.s32.totalorder %s293, %s294
      %p306 = scmp.eq.s32.totalorder %s27, 3
      %p307 = por %p305, %p306
      %p309 = scmp.ne.s32.totalorder %s294, %s308
      %p310 = scmp.eq.s32.totalorder %s27, 0
      %p311 = por %p309, %p310
      %s313 = sadd.s32 %s312, 1
      %p316 = scmp.eq.s32.totalorder %s21, 3
      %p317 = scmp.ne.s32.totalorder %s312, %s314
      %p318 = scmp.eq.s32.totalorder %s21, 0
      %p319 = por %p317, %p318
      %p320 = scmp.ne.s32.totalorder %s312, %s314
      %p321 = scmp.eq.s32.totalorder %s26, 3
      %p322 = por %p320, %p321
      %p323 = scmp.ne.s32.totalorder %s314, %s315
      %p324 = scmp.eq.s32.totalorder %s26, 0
      %p325 = por %p323, %p324
      %p326 = scmp.ne.s32.totalorder %s314, %s315
      %p327 = scmp.eq.s32.totalorder %s27, 3
      %p328 = por %p326, %p327
      %p330 = scmp.ne.s32.totalorder %s315, %s329
      %p331 = scmp.eq.s32.totalorder %s27, 0
      %p332 = por %p330, %p331
      %s333 = ssub.s32 %s28, %s40
      %p334 = scmp.eq.s32.totalorder %s333, 0
      %s336 = sadd.s32 %s335, 1
      %s337 = scalar_select %p334, %s335, %s336
      %p340 = pneg %p334
      %p341 = scmp.eq.s32.totalorder %s21, 3
      %p342 = por %p340, %p341
      %p343 = scmp.ne.s32.totalorder %s335, %s338
      %p344 = scmp.eq.s32.totalorder %s21, 0
      %p345 = por %p343, %p344
      %p346 = scmp.ne.s32.totalorder %s335, %s338
      %p347 = scmp.eq.s32.totalorder %s26, 3
      %p348 = por %p346, %p347
      %p349 = scmp.ne.s32.totalorder %s338, %s339
      %p350 = scmp.eq.s32.totalorder %s26, 0
      %p351 = por %p349, %p350
      %p352 = scmp.ne.s32.totalorder %s338, %s339
      %p353 = scmp.eq.s32.totalorder %s27, 3
      %p354 = por %p352, %p353
      %p356 = scmp.ne.s32.totalorder %s339, %s355
      %p357 = scmp.eq.s32.totalorder %s27, 0
      %p358 = por %p356, %p357
      %p359 = scmp.le.s32.totalorder 1, %s21
      %p360 = scmp.lt.s32.totalorder %s21, 5
      %p361 = pnand %p359, %p360
      %p362 = pneg %p361
      // Predicated region
      $region9: #{tpu_custom_call.1} parent=5 // pred_check
        _
      $region10: #{tpu_custom_call.1} parent=5 // pred_check_branch
        %364 = sbr.rel (%p361) target = $region12
      $region11: #{tpu_custom_call.1} parent=5 // pred_region
        %s365 = ssub.s32 %s21, 1
        // Predicated region
        $region13: #{tpu_custom_call.1} parent=11 // pred_check
          %p366 = pneg %p262
        $region14: #{tpu_custom_call.1} parent=11 // pred_check_branch
          %368 = sbr.rel (%p366) target = $region16
        $region15: #{tpu_custom_call.1} parent=11 // pred_region
          _
        $region16: #{tpu_custom_call.1} parent=11 // pred_fallthru
          _
        // Predicated region
        $region17: #{tpu_custom_call.1} parent=11 // pred_check
          %p369 = pneg %p283
        $region18: #{tpu_custom_call.1} parent=11 // pred_check_branch
          %371 = sbr.rel (%p369) target = $region20
        $region19: #{tpu_custom_call.1} parent=11 // pred_region
          _
        $region20: #{tpu_custom_call.1} parent=11 // pred_fallthru
          _
        // Predicated region
        $region21: #{tpu_custom_call.1} parent=11 // pred_check
          %p372 = pneg %p304
        $region22: #{tpu_custom_call.1} parent=11 // pred_check_branch
          %374 = sbr.rel (%p372) target = $region24
        $region23: #{tpu_custom_call.1} parent=11 // pred_region
          _
        $region24: #{tpu_custom_call.1} parent=11 // pred_fallthru
          _
        // Predicated region
        $region25: #{tpu_custom_call.1} parent=11 // pred_check
          %p375 = pneg %p325
        $region26: #{tpu_custom_call.1} parent=11 // pred_check_branch
          %377 = sbr.rel (%p375) target = $region28
        $region27: #{tpu_custom_call.1} parent=11 // pred_region
          _
        $region28: #{tpu_custom_call.1} parent=11 // pred_fallthru
          _
      $region12: #{tpu_custom_call.1} parent=5 // pred_fallthru
        _
      %p378 = scmp.lt.s32.totalorder %s21, 4
      // Predicated region
      $region29: #{tpu_custom_call.1} parent=5 // pred_check
        %p379 = pneg %p378
      $region30: #{tpu_custom_call.1} parent=5 // pred_check_branch
        %381 = sbr.rel (%p379) target = $region32
      $region31: #{tpu_custom_call.1} parent=5 // pred_region
        // Predicated region
        $region33: #{tpu_custom_call.1} parent=31 // pred_check
          %p382 = pneg %p53
        $region34: #{tpu_custom_call.1} parent=31 // pred_check_branch
          %384 = sbr.rel (%p382) target = $region36
        $region35: #{tpu_custom_call.1} parent=31 // pred_region
          %p385 = scmp.lt.s32.totalorder %s28, 1
          %s386 = scalar_select %p385, %s28, 1
          %s387 = smul.addr %s386, 8
          %s388 = scalar_lea.vmem %s0, %s387
        $region36: #{tpu_custom_call.1} parent=31 // pred_fallthru
          _
        // Predicated region
        $region37: #{tpu_custom_call.1} parent=31 // pred_check
          %p389 = pneg %p79
        $region38: #{tpu_custom_call.1} parent=31 // pred_check_branch
          %391 = sbr.rel (%p389) target = $region40
        $region39: #{tpu_custom_call.1} parent=31 // pred_region
          %p392 = scmp.lt.s32.totalorder %s28, 1
          %s393 = scalar_select %p392, %s28, 1
          %s394 = scalar_lea.vmem %s1, %s393
        $region40: #{tpu_custom_call.1} parent=31 // pred_fallthru
          _
        // Predicated region
        $region41: #{tpu_custom_call.1} parent=31 // pred_check
          %p395 = pneg %p105
        $region42: #{tpu_custom_call.1} parent=31 // pred_check_branch
          %397 = sbr.rel (%p395) target = $region44
        $region43: #{tpu_custom_call.1} parent=31 // pred_region
          %p398 = scmp.lt.s32.totalorder %s29, 1
          %s399 = scalar_select %p398, %s29, 1
          %s400 = smul.addr %s399, 4
          %s401 = smul.addr %s400, 4
          %s402 = scalar_lea.vmem %s2, %s401
        $region44: #{tpu_custom_call.1} parent=31 // pred_fallthru
          _
        // Predicated region
        $region45: #{tpu_custom_call.1} parent=31 // pred_check
          %p403 = pneg %p131
        $region46: #{tpu_custom_call.1} parent=31 // pred_check_branch
          %405 = sbr.rel (%p403) target = $region48
        $region47: #{tpu_custom_call.1} parent=31 // pred_region
          %p406 = scmp.lt.s32.totalorder %s29, 1
          %s407 = scalar_select %p406, %s29, 1
          %s408 = smul.addr %s407, 4
          %s409 = smul.addr %s408, 4
          %s410 = scalar_lea.vmem %s3, %s409
        $region48: #{tpu_custom_call.1} parent=31 // pred_fallthru
          _
        // Predicated region
        $region49: #{tpu_custom_call.1} parent=31 // pred_check
          %p411 = pneg %p157
        $region50: #{tpu_custom_call.1} parent=31 // pred_check_branch
          %413 = sbr.rel (%p411) target = $region52
        $region51: #{tpu_custom_call.1} parent=31 // pred_region
          %p414 = scmp.lt.s32.totalorder %s29, 1
          %s415 = scalar_select %p414, %s29, 1
          %s416 = smul.addr %s415, 4
          %s417 = smul.addr %s416, 4
          %s418 = scalar_lea.vmem %s4, %s417
        $region52: #{tpu_custom_call.1} parent=31 // pred_fallthru
          _
        // Predicated region
        $region53: #{tpu_custom_call.1} parent=31 // pred_check
          %p419 = pneg %p183
        $region54: #{tpu_custom_call.1} parent=31 // pred_check_branch
          %421 = sbr.rel (%p419) target = $region56
        $region55: #{tpu_custom_call.1} parent=31 // pred_region
          %p422 = scmp.lt.s32.totalorder %s29, 1
          %s423 = scalar_select %p422, %s29, 1
          %s424 = smul.addr %s423, 16
          %s425 = smul.addr %s424, 4
          %s426 = scalar_lea.vmem %s5, %s425
        $region56: #{tpu_custom_call.1} parent=31 // pred_fallthru
          _
        // Predicated region
        $region57: #{tpu_custom_call.1} parent=31 // pred_check
          %p427 = pneg %p209
        $region58: #{tpu_custom_call.1} parent=31 // pred_check_branch
          %429 = sbr.rel (%p427) target = $region60
        $region59: #{tpu_custom_call.1} parent=31 // pred_region
          %p430 = scmp.lt.s32.totalorder %s29, 1
          %s431 = scalar_select %p430, %s29, 1
          %s432 = smul.addr %s431, 2
          %s433 = smul.addr %s432, 8
          %s434 = scalar_lea.vmem %s6, %s433
        $region60: #{tpu_custom_call.1} parent=31 // pred_fallthru
          _
        // Predicated region
        $region61: #{tpu_custom_call.1} parent=31 // pred_check
          %p435 = pneg %p235
        $region62: #{tpu_custom_call.1} parent=31 // pred_check_branch
          %437 = sbr.rel (%p435) target = $region64
        $region63: #{tpu_custom_call.1} parent=31 // pred_region
          %p438 = scmp.lt.s32.totalorder %s29, 1
          %s439 = scalar_select %p438, %s29, 1
          %s440 = scalar_lea.vmem %s7, %s439
        $region64: #{tpu_custom_call.1} parent=31 // pred_fallthru
          _
      $region32: #{tpu_custom_call.1} parent=5 // pred_fallthru
        _
      %p441 = scmp.le.s32.totalorder 1, %s21
      %p442 = scmp.lt.s32.totalorder %s21, 5
      %p443 = pnand %p441, %p442
      %p444 = pneg %p443
      // Predicated region
      $region65: #{tpu_custom_call.1} parent=5 // pred_check
        _
      $region66: #{tpu_custom_call.1} parent=5 // pred_check_branch
        %446 = sbr.rel (%p443) target = $region68
      $region67: #{tpu_custom_call.1} parent=5 // pred_region
        %s447 = ssub.s32 %s21, 1
        %p448 = scmp.lt.s32.totalorder %s30, 1
        %s449 = scalar_select %p448, %s30, 1
        %s450 = smul.addr %s449, 8
        %s451 = scalar_lea.vmem %s0, %s450
        %p452 = pneg %p59
        %p453 = pneg %p56
        %p454 = scmp.lt.s32.totalorder %s30, 1
        %s455 = scalar_select %p454, %s30, 1
        %s456 = scalar_lea.vmem %s1, %s455
        %p457 = pneg %p85
        %p458 = pneg %p82
        %p459 = scmp.lt.s32.totalorder %s31, 1
        %s460 = scalar_select %p459, %s31, 1
        %s461 = smul.addr %s460, 4
        %s462 = smul.addr %s461, 4
        %s463 = scalar_lea.vmem %s2, %s462
        %p464 = pneg %p111
        %p465 = pneg %p108
        %p466 = scmp.lt.s32.totalorder %s31, 1
        %s467 = scalar_select %p466, %s31, 1
        %s468 = smul.addr %s467, 4
        %s469 = smul.addr %s468, 4
        %s470 = scalar_lea.vmem %s3, %s469
        %p471 = pneg %p137
        %p472 = pneg %p134
        %p473 = scmp.lt.s32.totalorder %s31, 1
        %s474 = scalar_select %p473, %s31, 1
        %s475 = smul.addr %s474, 4
        %s476 = smul.addr %s475, 4
        %s477 = scalar_lea.vmem %s4, %s476
        %p478 = pneg %p163
        %p479 = pneg %p160
        %p480 = scmp.lt.s32.totalorder %s31, 1
        %s481 = scalar_select %p480, %s31, 1
        %s482 = smul.addr %s481, 16
        %s483 = smul.addr %s482, 4
        %s484 = scalar_lea.vmem %s5, %s483
        %p485 = pneg %p189
        %p486 = pneg %p186
        %p487 = scmp.lt.s32.totalorder %s31, 1
        %s488 = scalar_select %p487, %s31, 1
        %s489 = smul.addr %s488, 2
        %s490 = smul.addr %s489, 8
        %s491 = scalar_lea.vmem %s6, %s490
        %p492 = pneg %p215
        %p493 = pneg %p212
        %p494 = scmp.lt.s32.totalorder %s31, 1
        %s495 = scalar_select %p494, %s31, 1
        %s496 = scalar_lea.vmem %s7, %s495
        %p497 = pneg %p241
        %p498 = pneg %p238
        %p499 = pneg %p262
        %p500 = pneg %p259
        %p501 = pneg %p283
        %p502 = pneg %p280
        %p503 = pneg %p304
        %p504 = pneg %p301
        %p505 = pneg %p325
        %p506 = pneg %p322
        %p507 = pneg %p351
        %p508 = pneg %p348
        %s509 = sand.u32 %s338, 1
        %s510 = scalar_lea.sflag [#allocation5], %s509
        %s511 = sand.u32 %s338, 1
        %s512 = scalar_lea.vmem [#allocation4], %s511
        %p513 = scmp.lt.s32.totalorder %s30, 1
        %s514 = scalar_select %p513, %s30, 1
        %s515 = smul.addr %s514, 8
        %s516 = scalar_lea.vmem %s0, %s515
        %p517 = scmp.lt.s32.totalorder %s30, 1
        %s518 = scalar_select %p517, %s30, 1
        %s519 = scalar_lea.vmem %s1, %s518
        %p520 = scmp.lt.s32.totalorder %s31, 1
        %s521 = scalar_select %p520, %s31, 1
        %s522 = smul.addr %s521, 4
        %s523 = smul.addr %s522, 4
        %s524 = scalar_lea.vmem %s2, %s523
        %p525 = scmp.lt.s32.totalorder %s31, 1
        %s526 = scalar_select %p525, %s31, 1
        %s527 = smul.addr %s526, 4
        %s528 = smul.addr %s527, 4
        %s529 = scalar_lea.vmem %s3, %s528
        %p530 = scmp.lt.s32.totalorder %s31, 1
        %s531 = scalar_select %p530, %s31, 1
        %s532 = smul.addr %s531, 4
        %s533 = smul.addr %s532, 4
        %s534 = scalar_lea.vmem %s4, %s533
        %p535 = scmp.lt.s32.totalorder %s31, 1
        %s536 = scalar_select %p535, %s31, 1
        %s537 = smul.addr %s536, 16
        %s538 = smul.addr %s537, 4
        %s539 = scalar_lea.vmem %s5, %s538
        %p540 = scmp.lt.s32.totalorder %s31, 1
        %s541 = scalar_select %p540, %s31, 1
        %s542 = smul.addr %s541, 2
        %s543 = smul.addr %s542, 8
        %s544 = scalar_lea.vmem %s6, %s543
        %p545 = scmp.lt.s32.totalorder %s31, 1
        %s546 = scalar_select %p545, %s31, 1
        %s547 = scalar_lea.vmem %s7, %s546
        %v549 = vld [vmem:[%s8] sm:$0x7f]
        %p550 = scmp.eq.s32.totalorder %s31, 0
        // Predicated region
        $region69: #{tpu_custom_call.1} parent=67 // pred_check
          %p551 = pneg %p550
        $region70: #{tpu_custom_call.1} parent=67 // pred_check_branch
          %553 = sbr.rel (%p551) target = $region72
        $region71: #{tpu_custom_call.1} parent=67 // pred_region
          %v554 = vld [vmem:[%s516] sm:$0xff]
          %vm555 = vcmask 261120
          %v556 = vsel %vm555, %v554, 0.0
          %557 = vadd.xlane.f32.xlu0 %v556
          %v558 = vpop.xlane.xlu0 %557
          %v559 = vrcp.pop 32.0
          %v560 = vmul.f32 %v558, %v559
          %v561 = vsub.f32 %v554, %v560
          %v562 = vmul.f32 %v561, %v561
          %v563 = vsel %vm555, %v562, 0.0
          %564 = vadd.xlane.f32.xlu0 %v563
          %v565 = vpop.xlane.xlu0 %564
          %v566 = vmul.f32 %v565, %v559
          %v567 = vadd.f32 %v566, 1e-12
          %v568 = vrsqrt.pop %v567
          %v569 = vmul.f32 %v561, %v568
          %v570 = vlaneseq
          %v571 = vshrl.u32 %v570, 7
          %v572 = vsub.s32 0, %v571
          %v573 = vrot.slane %v549, %v572
          %v574 = vmul.f32 %v569, %v573
          %v575 = vlaneseq
          %v576 = vshrl.u32 %v575, 7
          %v577 = vsub.s32 1, %v576
          %v578 = vrot.slane %v549, %v577
          %v579 = vadd.f32 %v574, %v578
          %580 = vst.msk [vmem:[#allocation2] sm:$0xff] %vm555, %v579
        $region72: #{tpu_custom_call.1} parent=67 // pred_fallthru
          _
        %v581 = vld [vmem:[#allocation2] sm:$0xff]
        %v582 = vld [vmem:[%s519] sm:$0x1]
        %v583 = vld [vmem:[%s524] sm:$0xf]
        %v584 = vld [vmem:[%s524 + $0x4] sm:$0xf]
        %v585 = vld [vmem:[%s524 + $0x8] sm:$0xf]
        %v586 = vld [vmem:[%s524 + $0xc] sm:$0xf]
        %v587 = vld [vmem:[%s529] sm:$0xf]
        %v588 = vld [vmem:[%s529 + $0x4] sm:$0xf]
        %v589 = vld [vmem:[%s529 + $0x8] sm:$0xf]
        %v590 = vld [vmem:[%s529 + $0xc] sm:$0xf]
        %v591 = vld [vmem:[%s534] sm:$0xf]
        %v592 = vld [vmem:[%s534 + $0x4] sm:$0xf]
        %v593 = vld [vmem:[%s534 + $0x8] sm:$0xf]
        %v594 = vld [vmem:[%s534 + $0xc] sm:$0xf]
        %v595 = vld [vmem:[%s539] sm:$0xf]
        %v596 = vld [vmem:[%s539 + $0x4] sm:$0xf]
        %v597 = vld [vmem:[%s539 + $0x8] sm:$0xf]
        %v598 = vld [vmem:[%s539 + $0xc] sm:$0xf]
        %v599 = vld [vmem:[%s539 + $0x10] sm:$0xf]
        %v600 = vld [vmem:[%s539 + $0x14] sm:$0xf]
        %v601 = vld [vmem:[%s539 + $0x18] sm:$0xf]
        %v602 = vld [vmem:[%s539 + $0x1c] sm:$0xf]
        %v603 = vld [vmem:[%s539 + $0x20] sm:$0xf]
        %v604 = vld [vmem:[%s539 + $0x24] sm:$0xf]
        %v605 = vld [vmem:[%s539 + $0x28] sm:$0xf]
        %v606 = vld [vmem:[%s539 + $0x2c] sm:$0xf]
        %v607 = vld [vmem:[%s539 + $0x30] sm:$0xf]
        %v608 = vld [vmem:[%s539 + $0x34] sm:$0xf]
        %v609 = vld [vmem:[%s539 + $0x38] sm:$0xf]
        %v610 = vld [vmem:[%s539 + $0x3c] sm:$0xf]
        %v611 = vld [vmem:[%s544] sm:$0xff]
        %v612 = vld [vmem:[%s544 + $0x8] sm:$0x1]
        %v613 = vld [vmem:[%s547] sm:$0x1]
        %v614 = vpack.c.bf16 %v581, %v581
        %v619 = vunpack.c.l.b16 %v583
        %v620 = vunpack.c.l.b16 %v584
        %v621 = vunpack.c.l.b16 %v585
        %v622 = vunpack.c.l.b16 %v586
        %v623 = vpack.c.b16 %v620, %v619
        %v624 = vpack.c.b16 %v622, %v621
        %vm627 = vcmask 261120
        %v629 = vsel %vm627, %v614, 0
        %631 = vmatprep.subr.bf16.mxu0 0
        %632 = vmatpush1.bf16.msra.mxu0 %v623
        %633 = vmatprep.subr.bf16.mxu0 0
        %634 = vmatpush1.bf16.msra.mxu0 %v624
        %635 = vmatprep.subr.bf16.mxu0 0
        %636 = vmatpush1.bf16.msra.mxu0 0
        %637 = vmatprep.subr.bf16.mxu0 0
        %638 = vmatpush1.bf16.msra.mxu0 0
        %639 = vmatprep.subr.bf16.mxu0 0
        %640 = vmatpush1.bf16.msra.mxu0 0
        %641 = vmatprep.subr.bf16.mxu0 0
        %642 = vmatpush1.bf16.msra.mxu0 0
        %643 = vmatprep.subr.bf16.mxu0 0
        %644 = vmatpush1.bf16.msra.mxu0 0
        %645 = vmatprep.subr.bf16.mxu0 0
        %646 = vmatpush1.bf16.msra.mxu0 0
        %647 = vmatprep.subr.bf16.mxu0 0
        %648 = vmatpush1.bf16.msra.mxu0 0
        %649 = vmatprep.subr.bf16.mxu0 0
        %650 = vmatpush1.bf16.msra.mxu0 0
        %651 = vmatprep.subr.bf16.mxu0 0
        %652 = vmatpush1.bf16.msra.mxu0 0
        %653 = vmatprep.subr.bf16.mxu0 0
        %654 = vmatpush1.bf16.msra.mxu0 0
        %655 = vmatprep.subr.bf16.mxu0 0
        %656 = vmatpush1.bf16.msra.mxu0 0
        %657 = vmatprep.subr.bf16.mxu0 0
        %658 = vmatpush1.bf16.msra.mxu0 0
        %659 = vmatprep.subr.bf16.mxu0 0
        %660 = vmatpush1.bf16.msra.mxu0 0
        %661 = vmatprep.subr.bf16.mxu0 0
        %662 = vmatpush1.bf16.msra.mxu0 0
        %663 = vmatprep.mubr.bf16.mxu0 0
        %664 = vmatmul.mubr.bf16.gmra.mrb[0].mxu0 %v629
        %v665 = vpop.f32.mrb[0].mxu0
        %v666 = vadd.f32 0.0, %v665
        %v667 = vpop.f32.mrb[0].mxu0
        %v668 = vpop.f32.mrb[0].mxu0
        %v669 = vpop.f32.mrb[0].mxu0
        %670 = vdwg.mxu0
        %v671 = vlaneseq
        %v672 = vshrl.u32 %v671, 7
        %v673 = vsub.s32 0, %v672
        %v674 = vrot.slane %v611, %v673
        %v675 = vadd.f32 %v666, %v674
        %v676 = vpack.c.bf16 %v675, %v675
        %v677 = vlaneseq
        %v678 = vshrl.u32 %v677, 7
        %v679 = vsub.s32 1, %v678
        %v680 = vrot.slane %v611, %v679
        %682 = vrot.lane.b32.xlu0 %v680, 32
        %v683 = vpop.permute.xlu0 %682
        %v685 = vadd.f32 %v666, %v683
        %v686 = vpack.c.bf16 %v685, %v685
        %v687 = vlaneseq
        %v688 = vshrl.u32 %v687, 7
        %v689 = vsub.s32 2, %v688
        %v690 = vrot.slane %v611, %v689
        %692 = vrot.lane.b32.xlu0 %v690, 64
        %v693 = vpop.permute.xlu0 %692
        %v695 = vadd.f32 %v666, %v693
        %v696 = vpack.c.bf16 %v695, %v695
        %698 = vrot.lane.b32.xlu0 %v686, 96
        %v699 = vpop.permute.xlu0 %698
        %vm700 = vcmask 130048
        %v702 = vsel %vm700, %v676, 0
        %v705 = vsel %vm700, %v699, 0
        %707 = vmatprep.subr.bf16.mxu0 0
        %708 = vmatpush1.bf16.xpose.msra.mxu0 %v705
        %709 = vmatprep.subr.bf16.mxu0 0
        %710 = vmatpush1.bf16.xpose.msra.mxu0 0
        %711 = vmatprep.subr.bf16.mxu0 0
        %712 = vmatpush1.bf16.xpose.msra.mxu0 0
        %713 = vmatprep.subr.bf16.mxu0 0
        %714 = vmatpush1.bf16.xpose.msra.mxu0 0
        %715 = vmatprep.subr.bf16.mxu0 0
        %716 = vmatpush1.bf16.xpose.msra.mxu0 0
        %717 = vmatprep.subr.bf16.mxu0 0
        %718 = vmatpush1.bf16.xpose.msra.mxu0 0
        %719 = vmatprep.subr.bf16.mxu0 0
        %720 = vmatpush1.bf16.xpose.msra.mxu0 0
        %721 = vmatprep.subr.bf16.mxu0 0
        %722 = vmatpush1.bf16.xpose.msra.mxu0 0
        %723 = vmatprep.subr.bf16.mxu0 0
        %724 = vmatpush1.bf16.xpose.msra.mxu0 0
        %725 = vmatprep.subr.bf16.mxu0 0
        %726 = vmatpush1.bf16.xpose.msra.mxu0 0
        %727 = vmatprep.subr.bf16.mxu0 0
        %728 = vmatpush1.bf16.xpose.msra.mxu0 0
        %729 = vmatprep.subr.bf16.mxu0 0
        %730 = vmatpush1.bf16.xpose.msra.mxu0 0
        %731 = vmatprep.subr.bf16.mxu0 0
        %732 = vmatpush1.bf16.xpose.msra.mxu0 0
        %733 = vmatprep.subr.bf16.mxu0 0
        %734 = vmatpush1.bf16.xpose.msra.mxu0 0
        %735 = vmatprep.subr.bf16.mxu0 0
        %736 = vmatpush1.bf16.xpose.msra.mxu0 0
        %737 = vmatprep.subr.bf16.mxu0 0
        %738 = vmatpush1.bf16.xpose.msra.mxu0 0
        %739 = vmatprep.mubr.bf16.mxu0 0
        %740 = vmatmul.mubr.bf16.gmra.mrb[0].mxu0 %v702
        %v741 = vpop.f32.mrb[0].mxu0
        %v742 = vadd.f32 0.0, %v741
        %v743 = vpop.f32.mrb[0].mxu0
        %v744 = vpop.f32.mrb[0].mxu0
        %v745 = vpop.f32.mrb[0].mxu0
        %746 = vdwg.mxu0
        %v747 = vmul.f32 %v742, 0.25
        %v749 = vlaneseq
        %v750 = vshrl.u32 %v749, 7
        %v751 = vsub.s32 0, %v750
        %v752 = vrot.slane %v582, %v751
        %v754 = vadd.f32 %v747, %v752
        %vm755 = vcmask 64512
        %v756 = vsel %vm755, %v754, -inf
        %757 = vmax.xlane.f32.xlu0 %v756
        %v758 = vpop.xlane.xlu0 %757
        %v759 = vsub.f32 %v754, %v758
        %v760 = vmul.f32 %v759, 1.442695
        %v761 = vpow.pop %v760
        %v762 = vsel %vm755, %v761, 0.0
        %763 = vadd.xlane.f32.xlu0 %v762
        %v764 = vpop.xlane.xlu0 %763
        %v765 = vrcp.pop %v764
        %v766 = vmul.f32 %v761, %v765
        %v767 = vpack.c.bf16 %v766, %v766
        %769 = vrot.lane.b32.xlu0 %v696, 64
        %v770 = vpop.permute.xlu0 %769
        %v772 = vsel %vm755, %v767, 0
        %vm774 = vcmask 1043456
        %v776 = vsel %vm774, %v770, 0
        %778 = vmatprep.subr.bf16.mxu0 0
        %779 = vmatpush1.bf16.msra.mxu0 %v776
        %780 = vmatprep.subr.bf16.mxu0 0
        %781 = vmatpush1.bf16.msra.mxu0 0
        %782 = vmatprep.subr.bf16.mxu0 0
        %783 = vmatpush1.bf16.msra.mxu0 0
        %784 = vmatprep.subr.bf16.mxu0 0
        %785 = vmatpush1.bf16.msra.mxu0 0
        %786 = vmatprep.subr.bf16.mxu0 0
        %787 = vmatpush1.bf16.msra.mxu0 0
        %788 = vmatprep.subr.bf16.mxu0 0
        %789 = vmatpush1.bf16.msra.mxu0 0
        %790 = vmatprep.subr.bf16.mxu0 0
        %791 = vmatpush1.bf16.msra.mxu0 0
        %792 = vmatprep.subr.bf16.mxu0 0
        %793 = vmatpush1.bf16.msra.mxu0 0
        %794 = vmatprep.subr.bf16.mxu0 0
        %795 = vmatpush1.bf16.msra.mxu0 0
        %796 = vmatprep.subr.bf16.mxu0 0
        %797 = vmatpush1.bf16.msra.mxu0 0
        %798 = vmatprep.subr.bf16.mxu0 0
        %799 = vmatpush1.bf16.msra.mxu0 0
        %800 = vmatprep.subr.bf16.mxu0 0
        %801 = vmatpush1.bf16.msra.mxu0 0
        %802 = vmatprep.subr.bf16.mxu0 0
        %803 = vmatpush1.bf16.msra.mxu0 0
        %804 = vmatprep.subr.bf16.mxu0 0
        %805 = vmatpush1.bf16.msra.mxu0 0
        %806 = vmatprep.subr.bf16.mxu0 0
        %807 = vmatpush1.bf16.msra.mxu0 0
        %808 = vmatprep.subr.bf16.mxu0 0
        %809 = vmatpush1.bf16.msra.mxu0 0
        %810 = vmatprep.mubr.bf16.mxu0 0
        %811 = vmatmul.mubr.bf16.gmra.mrb[0].mxu0 %v772
        %v812 = vpop.f32.mrb[0].mxu0
        %v813 = vadd.f32 0.0, %v812
        %v814 = vpop.f32.mrb[0].mxu0
        %v815 = vpop.f32.mrb[0].mxu0
        %v816 = vpop.f32.mrb[0].mxu0
        %817 = vdwg.mxu0
        %818 = vst.msk [vmem:[#allocation3] sm:$0xff] %vm700, %v813
        %820 = vrot.lane.b32.xlu0 %v676, 112
        %v821 = vpop.permute.xlu0 %820
        %822 = vrot.lane.b32.xlu0 %v686, 80
        %v823 = vpop.permute.xlu0 %822
        %v825 = vsel %vm700, %v821, 0
        %v828 = vsel %vm700, %v823, 0
        %830 = vmatprep.subr.bf16.mxu0 0
        %831 = vmatpush1.bf16.xpose.msra.mxu0 %v828
        %832 = vmatprep.subr.bf16.mxu0 0
        %833 = vmatpush1.bf16.xpose.msra.mxu0 0
        %834 = vmatprep.subr.bf16.mxu0 0
        %835 = vmatpush1.bf16.xpose.msra.mxu0 0
        %836 = vmatprep.subr.bf16.mxu0 0
        %837 = vmatpush1.bf16.xpose.msra.mxu0 0
        %838 = vmatprep.subr.bf16.mxu0 0
        %839 = vmatpush1.bf16.xpose.msra.mxu0 0
        %840 = vmatprep.subr.bf16.mxu0 0
        %841 = vmatpush1.bf16.xpose.msra.mxu0 0
        %842 = vmatprep.subr.bf16.mxu0 0
        %843 = vmatpush1.bf16.xpose.msra.mxu0 0
        %844 = vmatprep.subr.bf16.mxu0 0
        %845 = vmatpush1.bf16.xpose.msra.mxu0 0
        %846 = vmatprep.subr.bf16.mxu0 0
        %847 = vmatpush1.bf16.xpose.msra.mxu0 0
        %848 = vmatprep.subr.bf16.mxu0 0
        %849 = vmatpush1.bf16.xpose.msra.mxu0 0
        %850 = vmatprep.subr.bf16.mxu0 0
        %851 = vmatpush1.bf16.xpose.msra.mxu0 0
        %852 = vmatprep.subr.bf16.mxu0 0
        %853 = vmatpush1.bf16.xpose.msra.mxu0 0
        %854 = vmatprep.subr.bf16.mxu0 0
        %855 = vmatpush1.bf16.xpose.msra.mxu0 0
        %856 = vmatprep.subr.bf16.mxu0 0
        %857 = vmatpush1.bf16.xpose.msra.mxu0 0
        %858 = vmatprep.subr.bf16.mxu0 0
        %859 = vmatpush1.bf16.xpose.msra.mxu0 0
        %860 = vmatprep.subr.bf16.mxu0 0
        %861 = vmatpush1.bf16.xpose.msra.mxu0 0
        %862 = vmatprep.mubr.bf16.mxu0 0
        %863 = vmatmul.mubr.bf16.gmra.mrb[0].mxu0 %v825
        %v864 = vpop.f32.mrb[0].mxu0
        %v865 = vadd.f32 0.0, %v864
        %v866 = vpop.f32.mrb[0].mxu0
        %v867 = vpop.f32.mrb[0].mxu0
        %v868 = vpop.f32.mrb[0].mxu0
        %869 = vdwg.mxu0
        %v870 = vmul.f32 %v865, 0.25
        %v871 = vadd.f32 %v870, %v752
        %v872 = vsel %vm755, %v871, -inf
        %873 = vmax.xlane.f32.xlu0 %v872
        %v874 = vpop.xlane.xlu0 %873
        %v875 = vsub.f32 %v871, %v874
        %v876 = vmul.f32 %v875, 1.442695
        %v877 = vpow.pop %v876
        %v878 = vsel %vm755, %v877, 0.0
        %879 = vadd.xlane.f32.xlu0 %v878
        %v880 = vpop.xlane.xlu0 %879
        %v881 = vrcp.pop %v880
        %v882 = vmul.f32 %v877, %v881
        %v883 = vpack.c.bf16 %v882, %v882
        %884 = vrot.lane.b32.xlu0 %v696, 48
        %v885 = vpop.permute.xlu0 %884
        %v887 = vsel %vm755, %v883, 0
        %v890 = vsel %vm774, %v885, 0
        %892 = vmatprep.subr.bf16.mxu0 0
        %893 = vmatpush1.bf16.msra.mxu0 %v890
        %894 = vmatprep.subr.bf16.mxu0 0
        %895 = vmatpush1.bf16.msra.mxu0 0
        %896 = vmatprep.subr.bf16.mxu0 0
        %897 = vmatpush1.bf16.msra.mxu0 0
        %898 = vmatprep.subr.bf16.mxu0 0
        %899 = vmatpush1.bf16.msra.mxu0 0
        %900 = vmatprep.subr.bf16.mxu0 0
        %901 = vmatpush1.bf16.msra.mxu0 0
        %902 = vmatprep.subr.bf16.mxu0 0
        %903 = vmatpush1.bf16.msra.mxu0 0
        %904 = vmatprep.subr.bf16.mxu0 0
        %905 = vmatpush1.bf16.msra.mxu0 0
        %906 = vmatprep.subr.bf16.mxu0 0
        %907 = vmatpush1.bf16.msra.mxu0 0
        %908 = vmatprep.subr.bf16.mxu0 0
        %909 = vmatpush1.bf16.msra.mxu0 0
        %910 = vmatprep.subr.bf16.mxu0 0
        %911 = vmatpush1.bf16.msra.mxu0 0
        %912 = vmatprep.subr.bf16.mxu0 0
        %913 = vmatpush1.bf16.msra.mxu0 0
        %914 = vmatprep.subr.bf16.mxu0 0
        %915 = vmatpush1.bf16.msra.mxu0 0
        %916 = vmatprep.subr.bf16.mxu0 0
        %917 = vmatpush1.bf16.msra.mxu0 0
        %918 = vmatprep.subr.bf16.mxu0 0
        %919 = vmatpush1.bf16.msra.mxu0 0
        %920 = vmatprep.subr.bf16.mxu0 0
        %921 = vmatpush1.bf16.msra.mxu0 0
        %922 = vmatprep.subr.bf16.mxu0 0
        %923 = vmatpush1.bf16.msra.mxu0 0
        %924 = vmatprep.mubr.bf16.mxu0 0
        %925 = vmatmul.mubr.bf16.gmra.mrb[0].mxu0 %v887
        %v926 = vpop.f32.mrb[0].mxu0
        %v927 = vadd.f32 0.0, %v926
        %v928 = vpop.f32.mrb[0].mxu0
        %v929 = vpop.f32.mrb[0].mxu0
        %v930 = vpop.f32.mrb[0].mxu0
        %931 = vdwg.mxu0
        %933 = vrot.lane.b32.xlu0 %v927, 16
        %v934 = vpop.permute.xlu0 %933
        %vm936 = vcmask 261248
        %937 = vst.msk [vmem:[#allocation3] sm:$0xff] %vm936, %v934
        %v938 = vld [vmem:[#allocation3] sm:$0xff]
        %v939 = vpack.c.bf16 %v938, %v938
        %v940 = vlaneseq
        %v941 = vshrl.u32 %v940, 7
        %v942 = vsub.s32 3, %v941
        %v943 = vrot.slane %v611, %v942
        %v948 = vunpack.c.l.b16 %v587
        %v949 = vunpack.c.l.b16 %v588
        %v950 = vunpack.c.l.b16 %v589
        %v951 = vunpack.c.l.b16 %v590
        %v952 = vpack.c.b16 %v949, %v948
        %v953 = vpack.c.b16 %v951, %v950
        %v957 = vsel %vm627, %v939, 0
        %959 = vmatprep.subr.bf16.mxu0 0
        %960 = vmatpush1.bf16.msra.mxu0 %v952
        %961 = vmatprep.subr.bf16.mxu0 0
        %962 = vmatpush1.bf16.msra.mxu0 %v953
        %963 = vmatprep.subr.bf16.mxu0 0
        %964 = vmatpush1.bf16.msra.mxu0 0
        %965 = vmatprep.subr.bf16.mxu0 0
        %966 = vmatpush1.bf16.msra.mxu0 0
        %967 = vmatprep.subr.bf16.mxu0 0
        %968 = vmatpush1.bf16.msra.mxu0 0
        %969 = vmatprep.subr.bf16.mxu0 0
        %970 = vmatpush1.bf16.msra.mxu0 0
        %971 = vmatprep.subr.bf16.mxu0 0
        %972 = vmatpush1.bf16.msra.mxu0 0
        %973 = vmatprep.subr.bf16.mxu0 0
        %974 = vmatpush1.bf16.msra.mxu0 0
        %975 = vmatprep.subr.bf16.mxu0 0
        %976 = vmatpush1.bf16.msra.mxu0 0
        %977 = vmatprep.subr.bf16.mxu0 0
        %978 = vmatpush1.bf16.msra.mxu0 0
        %979 = vmatprep.subr.bf16.mxu0 0
        %980 = vmatpush1.bf16.msra.mxu0 0
        %981 = vmatprep.subr.bf16.mxu0 0
        %982 = vmatpush1.bf16.msra.mxu0 0
        %983 = vmatprep.subr.bf16.mxu0 0
        %984 = vmatpush1.bf16.msra.mxu0 0
        %985 = vmatprep.subr.bf16.mxu0 0
        %986 = vmatpush1.bf16.msra.mxu0 0
        %987 = vmatprep.subr.bf16.mxu0 0
        %988 = vmatpush1.bf16.msra.mxu0 0
        %989 = vmatprep.subr.bf16.mxu0 0
        %990 = vmatpush1.bf16.msra.mxu0 0
        %991 = vmatprep.mubr.bf16.mxu0 0
        %992 = vmatmul.mubr.bf16.gmra.mrb[0].mxu0 %v957
        %v993 = vpop.f32.mrb[0].mxu0
        %v994 = vadd.f32 %v943, %v993
        %v995 = vpop.f32.mrb[0].mxu0
        %v996 = vpop.f32.mrb[0].mxu0
        %v997 = vpop.f32.mrb[0].mxu0
        %998 = vdwg.mxu0
        %v999 = vadd.f32 %v994, %v581
        %v1000 = vsel %vm627, %v999, 0.0
        %1001 = vadd.xlane.f32.xlu0 %v1000
        %v1002 = vpop.xlane.xlu0 %1001
        %v1003 = vrcp.pop 32.0
        %v1004 = vmul.f32 %v1002, %v1003
        %v1005 = vsub.f32 %v999, %v1004
        %v1006 = vmul.f32 %v1005, %v1005
        %v1007 = vsel %vm627, %v1006, 0.0
        %1008 = vadd.xlane.f32.xlu0 %v1007
        %v1009 = vpop.xlane.xlu0 %1008
        %v1010 = vmul.f32 %v1009, %v1003
        %v1011 = vadd.f32 %v1010, 1e-12
        %v1012 = vrsqrt.pop %v1011
        %v1013 = vmul.f32 %v1005, %v1012
        %v1014 = vlaneseq
        %v1015 = vshrl.u32 %v1014, 7
        %v1016 = vsub.s32 4, %v1015
        %v1017 = vrot.slane %v611, %v1016
        %v1018 = vmul.f32 %v1013, %v1017
        %v1019 = vlaneseq
        %v1020 = vshrl.u32 %v1019, 7
        %v1021 = vsub.s32 5, %v1020
        %v1022 = vrot.slane %v611, %v1021
        %v1023 = vadd.f32 %v1018, %v1022
        %v1024 = vpack.c.bf16 %v1023, %v1023
        %v1026 = vlaneseq
        %v1027 = vshrl.u32 %v1026, 7
        %v1028 = vsub.s32 0, %v1027
        %v1029 = vrot.slane %v613, %v1028
        %v1035 = vunpack.c.l.b16 %v591
        %v1036 = vunpack.c.l.b16 %v592
        %v1037 = vunpack.c.l.b16 %v593
        %v1038 = vunpack.c.l.b16 %v594
        %v1039 = vpack.c.b16 %v1036, %v1035
        %v1040 = vpack.c.b16 %v1038, %v1037
        %v1044 = vsel %vm627, %v1024, 0
        %1046 = vmatprep.subr.bf16.mxu0 0
        %1047 = vmatpush1.bf16.msra.mxu0 %v1039
        %1048 = vmatprep.subr.bf16.mxu0 0
        %1049 = vmatpush1.bf16.msra.mxu0 %v1040
        %1050 = vmatprep.subr.bf16.mxu0 0
        %1051 = vmatpush1.bf16.msra.mxu0 0
        %1052 = vmatprep.subr.bf16.mxu0 0
        %1053 = vmatpush1.bf16.msra.mxu0 0
        %1054 = vmatprep.subr.bf16.mxu0 0
        %1055 = vmatpush1.bf16.msra.mxu0 0
        %1056 = vmatprep.subr.bf16.mxu0 0
        %1057 = vmatpush1.bf16.msra.mxu0 0
        %1058 = vmatprep.subr.bf16.mxu0 0
        %1059 = vmatpush1.bf16.msra.mxu0 0
        %1060 = vmatprep.subr.bf16.mxu0 0
        %1061 = vmatpush1.bf16.msra.mxu0 0
        %1062 = vmatprep.subr.bf16.mxu0 0
        %1063 = vmatpush1.bf16.msra.mxu0 0
        %1064 = vmatprep.subr.bf16.mxu0 0
        %1065 = vmatpush1.bf16.msra.mxu0 0
        %1066 = vmatprep.subr.bf16.mxu0 0
        %1067 = vmatpush1.bf16.msra.mxu0 0
        %1068 = vmatprep.subr.bf16.mxu0 0
        %1069 = vmatpush1.bf16.msra.mxu0 0
        %1070 = vmatprep.subr.bf16.mxu0 0
        %1071 = vmatpush1.bf16.msra.mxu0 0
        %1072 = vmatprep.subr.bf16.mxu0 0
        %1073 = vmatpush1.bf16.msra.mxu0 0
        %1074 = vmatprep.subr.bf16.mxu0 0
        %1075 = vmatpush1.bf16.msra.mxu0 0
        %1076 = vmatprep.subr.bf16.mxu0 0
        %1077 = vmatpush1.bf16.msra.mxu0 0
        %1078 = vmatprep.mubr.bf16.mxu0 0
        %1079 = vmatmul.mubr.bf16.gmra.mrb[0].mxu0 %v1044
        %v1080 = vpop.f32.mrb[0].mxu0
        %v1081 = vadd.f32 %v1029, %v1080
        %v1082 = vpop.f32.mrb[0].mxu0
        %v1083 = vpop.f32.mrb[0].mxu0
        %v1084 = vpop.f32.mrb[0].mxu0
        %1085 = vdwg.mxu0
        %v1086 = vmul.f32 %v1081, %v1081
        %v1087 = vmul.f32 %v1081, %v1086
        %v1088 = vmul.f32 %v1087, 0.044715
        %v1089 = vadd.f32 %v1081, %v1088
        %v1090 = vmul.f32 %v1089, 0.7978846
        %v1091 = vtanh.pop %v1090
        %v1092 = vadd.f32 %v1091, 1.0
        %v1093 = vmul.f32 %v1092, 0.5
        %v1094 = vmul.f32 %v1081, %v1093
        %v1095 = vpack.c.bf16 %v1094, %v1094
        %v1096 = vlaneseq
        %v1097 = vshrl.u32 %v1096, 7
        %v1098 = vsub.s32 6, %v1097
        %v1099 = vrot.slane %v611, %v1098
        %v1116 = vunpack.c.l.b16 %v595
        %v1117 = vunpack.c.l.b16 %v596
        %v1118 = vunpack.c.l.b16 %v597
        %v1119 = vunpack.c.l.b16 %v598
        %v1120 = vunpack.c.l.b16 %v599
        %v1121 = vunpack.c.l.b16 %v600
        %v1122 = vunpack.c.l.b16 %v601
        %v1123 = vunpack.c.l.b16 %v602
        %v1124 = vunpack.c.l.b16 %v603
        %v1125 = vunpack.c.l.b16 %v604
        %v1126 = vunpack.c.l.b16 %v605
        %v1127 = vunpack.c.l.b16 %v606
        %v1128 = vunpack.c.l.b16 %v607
        %v1129 = vunpack.c.l.b16 %v608
        %v1130 = vunpack.c.l.b16 %v609
        %v1131 = vunpack.c.l.b16 %v610
        %v1132 = vpack.c.b16 %v1117, %v1116
        %v1133 = vpack.c.b16 %v1119, %v1118
        %v1134 = vpack.c.b16 %v1121, %v1120
        %v1135 = vpack.c.b16 %v1123, %v1122
        %v1136 = vpack.c.b16 %v1125, %v1124
        %v1137 = vpack.c.b16 %v1127, %v1126
        %v1138 = vpack.c.b16 %v1129, %v1128
        %v1139 = vpack.c.b16 %v1131, %v1130
        %1148 = vmatprep.subr.bf16.mxu0 0
        %1149 = vmatpush1.bf16.msra.mxu0 %v1132
        %1150 = vmatprep.subr.bf16.mxu0 0
        %1151 = vmatpush1.bf16.msra.mxu0 %v1133
        %1152 = vmatprep.subr.bf16.mxu0 0
        %1153 = vmatpush1.bf16.msra.mxu0 %v1134
        %1154 = vmatprep.subr.bf16.mxu0 0
        %1155 = vmatpush1.bf16.msra.mxu0 %v1135
        %1156 = vmatprep.subr.bf16.mxu0 0
        %1157 = vmatpush1.bf16.msra.mxu0 %v1136
        %1158 = vmatprep.subr.bf16.mxu0 0
        %1159 = vmatpush1.bf16.msra.mxu0 %v1137
        %1160 = vmatprep.subr.bf16.mxu0 0
        %1161 = vmatpush1.bf16.msra.mxu0 %v1138
        %1162 = vmatprep.subr.bf16.mxu0 0
        %1163 = vmatpush1.bf16.msra.mxu0 %v1139
        %1164 = vmatprep.subr.bf16.mxu0 0
        %1165 = vmatpush1.bf16.msra.mxu0 0
        %1166 = vmatprep.subr.bf16.mxu0 0
        %1167 = vmatpush1.bf16.msra.mxu0 0
        %1168 = vmatprep.subr.bf16.mxu0 0
        %1169 = vmatpush1.bf16.msra.mxu0 0
        %1170 = vmatprep.subr.bf16.mxu0 0
        %1171 = vmatpush1.bf16.msra.mxu0 0
        %1172 = vmatprep.subr.bf16.mxu0 0
        %1173 = vmatpush1.bf16.msra.mxu0 0
        %1174 = vmatprep.subr.bf16.mxu0 0
        %1175 = vmatpush1.bf16.msra.mxu0 0
        %1176 = vmatprep.subr.bf16.mxu0 0
        %1177 = vmatpush1.bf16.msra.mxu0 0
        %1178 = vmatprep.subr.bf16.mxu0 0
        %1179 = vmatpush1.bf16.msra.mxu0 0
        %1180 = vmatprep.mubr.bf16.mxu0 0
        %1181 = vmatmul.mubr.bf16.gmra.mrb[0].mxu0 %v1095
        %v1182 = vpop.f32.mrb[0].mxu0
        %v1183 = vadd.f32 %v1099, %v1182
        %v1184 = vpop.f32.mrb[0].mxu0
        %v1185 = vpop.f32.mrb[0].mxu0
        %v1186 = vpop.f32.mrb[0].mxu0
        %1187 = vdwg.mxu0
        %v1188 = vadd.f32 %v1183, %v1023
        %v1189 = vsel %vm627, %v1188, 0.0
        %1190 = vadd.xlane.f32.xlu0 %v1189
        %v1191 = vpop.xlane.xlu0 %1190
        %v1192 = vmul.f32 %v1191, %v1003
        %v1193 = vsub.f32 %v1188, %v1192
        %v1194 = vmul.f32 %v1193, %v1193
        %v1195 = vsel %vm627, %v1194, 0.0
        %1196 = vadd.xlane.f32.xlu0 %v1195
        %v1197 = vpop.xlane.xlu0 %1196
        %v1198 = vmul.f32 %v1197, %v1003
        %v1199 = vadd.f32 %v1198, 1e-12
        %v1200 = vrsqrt.pop %v1199
        %v1201 = vmul.f32 %v1193, %v1200
        %v1202 = vlaneseq
        %v1203 = vshrl.u32 %v1202, 7
        %v1204 = vsub.s32 7, %v1203
        %v1205 = vrot.slane %v611, %v1204
        %v1206 = vmul.f32 %v1201, %v1205
        %v1207 = vlaneseq
        %v1208 = vshrl.u32 %v1207, 7
        %v1209 = vsub.s32 0, %v1208
        %v1210 = vrot.slane %v612, %v1209
        %v1211 = vadd.f32 %v1206, %v1210
        %1212 = vst.msk [vmem:[#allocation2] sm:$0xff] %vm627, %v1211
        %p1213 = scmp.eq.s32.totalorder %s31, 1
        // Predicated region
        $region73: #{tpu_custom_call.1} parent=67 // pred_check
          %p1214 = pneg %p1213
        $region74: #{tpu_custom_call.1} parent=67 // pred_check_branch
          %1216 = sbr.rel (%p1214) target = $region76
        $region75: #{tpu_custom_call.1} parent=67 // pred_region
          %v1217 = vld [vmem:[%s9] sm:$0xf]
          %v1218 = vld [vmem:[%s9 + $0x4] sm:$0xf]
          %v1219 = vld [vmem:[%s9 + $0x8] sm:$0xf]
          %v1220 = vld [vmem:[%s9 + $0xc] sm:$0xf]
          %v1221 = vld [vmem:[%s10] sm:$0xff]
          %v1222 = vld [vmem:[%s10 + $0x8] sm:$0xff]
          %v1223 = vld [vmem:[%s10 + $0x10] sm:$0xff]
          %v1224 = vld [vmem:[%s10 + $0x18] sm:$0xff]
          %v1225 = vld [vmem:[%s11] sm:$0x1]
          %vm1226 = vcmask 253952
          %v1227 = vsel %vm1226, %v1211, 0.0
          %1228 = vadd.xlane.f32.xlu0 %v1227
          %v1229 = vpop.xlane.xlu0 %1228
          %v1230 = vmul.f32 %v1229, %v1003
          %v1231 = vsub.f32 %v1211, %v1230
          %v1232 = vmul.f32 %v1231, %v1231
          %v1233 = vsel %vm1226, %v1232, 0.0
          %1234 = vadd.xlane.f32.xlu0 %v1233
          %v1235 = vpop.xlane.xlu0 %1234
          %v1236 = vmul.f32 %v1235, %v1003
          %v1237 = vadd.f32 %v1236, 1e-05
          %v1238 = vrsqrt.pop %v1237
          %v1239 = vmul.f32 %v1231, %v1238
          %v1241 = vrot.slane %v549, 2
          %v1243 = vmul.f32 %v1239, %v1241
          %v1244 = vrot.slane %v549, 3
          %v1246 = vadd.f32 %v1243, %v1244
          %v1247 = vpack.c.bf16 %v1246, %v1246
          %v1252 = vunpack.c.l.b16 %v1217
          %v1253 = vunpack.c.l.b16 %v1218
          %v1254 = vunpack.c.l.b16 %v1219
          %v1255 = vunpack.c.l.b16 %v1220
          %v1256 = vpack.c.b16 %v1253, %v1252
          %v1257 = vpack.c.b16 %v1255, %v1254
          %v1260 = vrot.slane %v549, 4
          %v1263 = vsel %vm627, %v1247, 0
          %1265 = vmatprep.subr.bf16.mxu0 0
          %1266 = vmatpush1.bf16.msra.mxu0 %v1256
          %1267 = vmatprep.subr.bf16.mxu0 0
          %1268 = vmatpush1.bf16.msra.mxu0 %v1257
          %1269 = vmatprep.subr.bf16.mxu0 0
          %1270 = vmatpush1.bf16.msra.mxu0 0
          %1271 = vmatprep.subr.bf16.mxu0 0
          %1272 = vmatpush1.bf16.msra.mxu0 0
          %1273 = vmatprep.subr.bf16.mxu0 0
          %1274 = vmatpush1.bf16.msra.mxu0 0
          %1275 = vmatprep.subr.bf16.mxu0 0
          %1276 = vmatpush1.bf16.msra.mxu0 0
          %1277 = vmatprep.subr.bf16.mxu0 0
          %1278 = vmatpush1.bf16.msra.mxu0 0
          %1279 = vmatprep.subr.bf16.mxu0 0
          %1280 = vmatpush1.bf16.msra.mxu0 0
          %1281 = vmatprep.subr.bf16.mxu0 0
          %1282 = vmatpush1.bf16.msra.mxu0 0
          %1283 = vmatprep.subr.bf16.mxu0 0
          %1284 = vmatpush1.bf16.msra.mxu0 0
          %1285 = vmatprep.subr.bf16.mxu0 0
          %1286 = vmatpush1.bf16.msra.mxu0 0
          %1287 = vmatprep.subr.bf16.mxu0 0
          %1288 = vmatpush1.bf16.msra.mxu0 0
          %1289 = vmatprep.subr.bf16.mxu0 0
          %1290 = vmatpush1.bf16.msra.mxu0 0
          %1291 = vmatprep.subr.bf16.mxu0 0
          %1292 = vmatpush1.bf16.msra.mxu0 0
          %1293 = vmatprep.subr.bf16.mxu0 0
          %1294 = vmatpush1.bf16.msra.mxu0 0
          %1295 = vmatprep.subr.bf16.mxu0 0
          %1296 = vmatpush1.bf16.msra.mxu0 0
          %1297 = vmatprep.mubr.bf16.mxu0 0
          %1298 = vmatmul.mubr.bf16.gmra.mrb[0].mxu0 %v1263
          %v1299 = vpop.f32.mrb[0].mxu0
          %v1300 = vadd.f32 %v1260, %v1299
          %v1301 = vpop.f32.mrb[0].mxu0
          %v1302 = vpop.f32.mrb[0].mxu0
          %v1303 = vpop.f32.mrb[0].mxu0
          %1304 = vdwg.mxu0
          %v1305 = vmax.f32 %v1300, 0.0
          %v1306 = vsel %vm1226, %v1305, 0.0
          %1307 = vadd.xlane.f32.xlu0 %v1306
          %v1308 = vpop.xlane.xlu0 %1307
          %v1309 = vmul.f32 %v1308, %v1003
          %v1310 = vsub.f32 %v1305, %v1309
          %v1311 = vmul.f32 %v1310, %v1310
          %v1312 = vsel %vm1226, %v1311, 0.0
          %1313 = vadd.xlane.f32.xlu0 %v1312
          %v1314 = vpop.xlane.xlu0 %1313
          %v1315 = vmul.f32 %v1314, %v1003
          %v1316 = vadd.f32 %v1315, 1e-05
          %v1317 = vrsqrt.pop %v1316
          %v1318 = vmul.f32 %v1310, %v1317
          %v1319 = vrot.slane %v549, 5
          %v1321 = vmul.f32 %v1318, %v1319
          %v1322 = vrot.slane %v549, 6
          %v1324 = vadd.f32 %v1321, %v1322
          %v1326 = vsel %vm627, %v1324, 0
          %1328 = vmatprep.subr.mxu0 0.0
          %1329 = vmatpush1.msra.mxu0 %v1221
          %1330 = vmatprep.subr.mxu0 0.0
          %1331 = vmatpush1.msra.mxu0 %v1222
          %1332 = vmatprep.subr.mxu0 0.0
          %1333 = vmatpush1.msra.mxu0 %v1223
          %1334 = vmatprep.subr.mxu0 0.0
          %1335 = vmatpush1.msra.mxu0 %v1224
          %1336 = vmatprep.subr.mxu0 0.0
          %1337 = vmatpush1.msra.mxu0 0.0
          %1338 = vmatprep.subr.mxu0 0.0
          %1339 = vmatpush1.msra.mxu0 0.0
          %1340 = vmatprep.subr.mxu0 0.0
          %1341 = vmatpush1.msra.mxu0 0.0
          %1342 = vmatprep.subr.mxu0 0.0
          %1343 = vmatpush1.msra.mxu0 0.0
          %1344 = vmatprep.subr.mxu0 0.0
          %1345 = vmatpush1.msra.mxu0 0.0
          %1346 = vmatprep.subr.mxu0 0.0
          %1347 = vmatpush1.msra.mxu0 0.0
          %1348 = vmatprep.subr.mxu0 0.0
          %1349 = vmatpush1.msra.mxu0 0.0
          %1350 = vmatprep.subr.mxu0 0.0
          %1351 = vmatpush1.msra.mxu0 0.0
          %1352 = vmatprep.subr.mxu0 0.0
          %1353 = vmatpush1.msra.mxu0 0.0
          %1354 = vmatprep.subr.mxu0 0.0
          %1355 = vmatpush1.msra.mxu0 0.0
          %1356 = vmatprep.subr.mxu0 0.0
          %1357 = vmatpush1.msra.mxu0 0.0
          %1358 = vmatprep.subr.mxu0 0.0
          %1359 = vmatpush1.msra.mxu0 0.0
          %1360 = vmatprep.subr.mxu0 0.0
          %1361 = vmatpush1.msra.mxu0 0.0
          %1362 = vmatprep.subr.mxu0 0.0
          %1363 = vmatpush1.msra.mxu0 0.0
          %1364 = vmatprep.subr.mxu0 0.0
          %1365 = vmatpush1.msra.mxu0 0.0
          %1366 = vmatprep.subr.mxu0 0.0
          %1367 = vmatpush1.msra.mxu0 0.0
          %1368 = vmatprep.subr.mxu0 0.0
          %1369 = vmatpush1.msra.mxu0 0.0
          %1370 = vmatprep.subr.mxu0 0.0
          %1371 = vmatpush1.msra.mxu0 0.0
          %1372 = vmatprep.subr.mxu0 0.0
          %1373 = vmatpush1.msra.mxu0 0.0
          %1374 = vmatprep.subr.mxu0 0.0
          %1375 = vmatpush1.msra.mxu0 0.0
          %1376 = vmatprep.subr.mxu0 0.0
          %1377 = vmatpush1.msra.mxu0 0.0
          %1378 = vmatprep.subr.mxu0 0.0
          %1379 = vmatpush1.msra.mxu0 0.0
          %1380 = vmatprep.subr.mxu0 0.0
          %1381 = vmatpush1.msra.mxu0 0.0
          %1382 = vmatprep.subr.mxu0 0.0
          %1383 = vmatpush1.msra.mxu0 0.0
          %1384 = vmatprep.subr.mxu0 0.0
          %1385 = vmatpush1.msra.mxu0 0.0
          %1386 = vmatprep.subr.mxu0 0.0
          %1387 = vmatpush1.msra.mxu0 0.0
          %1388 = vmatprep.subr.mxu0 0.0
          %1389 = vmatpush1.msra.mxu0 0.0
          %1390 = vmatprep.subr.mxu0 0.0
          %1391 = vmatpush1.msra.mxu0 0.0
          %1392 = vmatprep.mubr.f32.mxu0 0.0
          %1393 = vmatmul.mubr.f32.gmra.mrb[0].mxu0 %v1326
          %v1394 = vpop.f32.mrb[0].mxu0
          %v1395 = vadd.f32 %v1225, %v1394
          %v1396 = vpop.f32.mrb[0].mxu0
          %1397 = vdwg.mxu0
          %v1398 = vxor.u32 %v1395, 2147483648
          %v1399 = vmul.f32 %v1398, 1.442695
          %v1400 = vpow.pop %v1399
          %v1401 = vadd.f32 %v1400, 1.0
          %v1402 = vrcp.pop %v1401
          %v1403 = vmul.f32 1.0, %v1402
          %vm1404 = vcmask 57344
          %1405 = vst.msk [vmem:[%s512] sm:$0x1] %vm1404, %v1403
        $region76: #{tpu_custom_call.1} parent=67 // pred_fallthru
          _
        %s1406 = sand.u32 %s338, 1
        %s1407 = scalar_lea.sflag [#allocation5], %s1406
        %s1408 = sand.u32 %s338, 1
        %s1409 = scalar_lea.vmem [#allocation4], %s1408
        // Predicated region
        $region77: #{tpu_custom_call.1} parent=67 // pred_check
          %p1410 = pneg %p348
        $region78: #{tpu_custom_call.1} parent=67 // pred_check_branch
          %1412 = sbr.rel (%p1410) target = $region80
        $region79: #{tpu_custom_call.1} parent=67 // pred_region
          %s1414 = ssub.s32 16, 16
          %1415 = vsyncadd %s1407, %s1414
          %s1416 = smul.addr %s30, 16
          %s1417 = scalar_lea.hbm %s12, %s1416
          %s1419 = sshll.u32 %s1409, 4
          %s1420 = int_to_ptr.vmem [resolvable:$true] %s1419
          %1422 = dma.vmem_to_hbm [thread:$0]  %s1420, 16, %s1417, %s1407
        $region80: #{tpu_custom_call.1} parent=67 // pred_fallthru
          _
      $region68: #{tpu_custom_call.1} parent=5 // pred_fallthru
        _
      %p1423 = scmp.le.s32.totalorder 2, %s21
      // Predicated region
      $region81: #{tpu_custom_call.1} parent=5 // pred_check
        %p1424 = pneg %p1423
      $region82: #{tpu_custom_call.1} parent=5 // pred_check_branch
        %1426 = sbr.rel (%p1424) target = $region84
      $region83: #{tpu_custom_call.1} parent=5 // pred_region
        %s1427 = ssub.s32 %s21, 2
        // Predicated region
        $region85: #{tpu_custom_call.1} parent=83 // pred_check
          %p1428 = pneg %p354
        $region86: #{tpu_custom_call.1} parent=83 // pred_check_branch
          %1430 = sbr.rel (%p1428) target = $region88
        $region87: #{tpu_custom_call.1} parent=83 // pred_region
          %s1431 = sand.u32 %s339, 1
          %s1432 = scalar_lea.sflag [#allocation5], %s1431
          %s1433 = sand.u32 %s339, 1
          %s1434 = scalar_lea.vmem [#allocation4], %s1433
          %1435 = dma.done %s1432, 16
        $region88: #{tpu_custom_call.1} parent=83 // pred_fallthru
          _
      $region84: #{tpu_custom_call.1} parent=5 // pred_fallthru
        _
    $region6: #{tpu_custom_call.1} parent=1 // loop_footer
      %s25 = sadd.s32 1, %s21
    $region7: #{tpu_custom_call.1} parent=1 // loop_footer_branch
      %20 = sbr.rel target = $region3
    $region8: #{tpu_custom_call.1} parent=1 // loop_exit
      _
    %1436 = vsyncpa [#allocation5], 1
    %s1437 = scalar_lea.sflag [#allocation5], 1
    %1438 = vsyncpa %s1437, 1

</llo_original>
